<compile_context>
chip_gen: v5e
topology: v5e:2x2
jax: 0.10.0
libtpu: 0.0.40
codegen_flags: <defaults>
</compile_context>

<pallas_src>
import functools

import jax
import jax.numpy as jnp
from jax.experimental import pallas as pl
from jax.experimental.pallas import tpu as pltpu


# ---------------------------------------------------------------------------
# Kernel
# ---------------------------------------------------------------------------
def _monotone_submodular_kernel(m_layers, lamb, n_phi, phi_in_dims, Hp, *refs):
    """refs = [x (1,1,L) tile, seg (block_b,L), w1b (Hp,3), w2 (Hp,Hp),
               w3b (Mp,Hp+1), phi_wb_0, ..., phi_wb_{n_phi-1}, out (block_b,od)]"""
    x_ref, seg_ref, w1b_ref, w2_ref, w3b_ref = refs[:5]
    phi_refs = refs[5:5 + n_phi]
    out_ref = refs[5 + n_phi]

    x = x_ref[0]                       # (1, L): whole batch tile, lane-dense
    w1 = w1b_ref[:, 0:1]               # (Hp, 1)  stacked first-layer weights
    b1 = w1b_ref[:, 1:2]               # (Hp, 1)
    b2 = w1b_ref[:, 2:3]               # (Hp, 1)
    w2 = w2_ref[...]                   # (Hp, Hp) block-diagonal second layer
    w3 = w3b_ref[:, :Hp]               # (Mp, Hp) stacked third layer
    b3 = w3b_ref[:, Hp:Hp + 1]         # (Mp, 1)

    # ---- all m-nets, all rows, all set elements in one fused chain ----------
    h = jnp.maximum(x * w1 + b1, 0.0)                                   # (Hp, L) VPU
    h = jnp.maximum(
        jnp.dot(w2, h, preferred_element_type=jnp.float32) + b2, 0.0)   # (Hp, L) MXU
    h = jnp.dot(w3, h, preferred_element_type=jnp.float32) + b3         # (Mp, L) MXU
    # stable softplus (matches torch.nn.Softplus, beta=1)
    h = jnp.maximum(h, 0.0) + jnp.log(1.0 + jnp.exp(-jnp.abs(h)))

    # ---- per-row set sums via an MXU segment-sum: (block_b,L)x(Mp,L)^T ------
    seg = seg_ref[...]                                                  # (block_b, L)
    s = jax.lax.dot_general(seg, h, (((1,), (1,)), ((), ())),
                            preferred_element_type=jnp.float32)         # (block_b, Mp)

    # ---- phi recurrence, batched over the whole tile ------------------------
    ret = s[:, 0:1]                                                     # (block_b, 1)
    for i in range(1, m_layers):
        z = lamb * s[:, i:i + 1] + (1.0 - lamb) * ret
        for j in range(n_phi):
            in_j = phi_in_dims[j]
            wb = phi_refs[j][i - 1]                                     # (in_j+1, out_j)
            w = wb[:in_j, :]
            b = wb[in_j:in_j + 1, :]
            if in_j == 1:
                z = z * w + b                                           # K=1 -> VPU
            else:
                z = jnp.dot(z, w, preferred_element_type=jnp.float32) + b
            if j < n_phi - 1:                                           # IncreasingConcaveNet
                z = jnp.minimum(z, 0.0)
        ret = z
    out_ref[...] = ret                                                  # one block store


# ---------------------------------------------------------------------------
# Parameter init (PyTorch-style) and packing
# ---------------------------------------------------------------------------
def _init_linear(key, in_dim, out_dim):
    """uniform(-1/sqrt(in), 1/sqrt(in)); returns (W^T of shape (in, out), b (out,))."""
    k_w, k_b = jax.random.split(key)
    bound = 1.0 / float(in_dim) ** 0.5
    w = jax.random.uniform(k_w, (out_dim, in_dim), jnp.float32, -bound, bound)
    b = jax.random.uniform(k_b, (out_dim,), jnp.float32, -bound, bound)
    return w.T, b


def init_params(key, phi_layers, m_layers):
    params = {"m": [], "phi": []}
    m_dims = [(1, 10), (10, 10), (10, 1)]
    for _ in range(m_layers):
        net = []
        for (i_d, o_d) in m_dims:
            key, k = jax.random.split(key)
            net.append(_init_linear(k, i_d, o_d))
        params["m"].append(net)
    phi_dims = list(zip(phi_layers[:-1], phi_layers[1:]))
    for _ in range(m_layers):
        net = []
        for (i_d, o_d) in phi_dims:
            key, k = jax.random.split(key)
            net.append(_init_linear(k, i_d, o_d))
        params["phi"].append(net)
    return params


def _pack_params(params, phi_layers, m_layers):
    """Fuse the m_layers independent m-nets into one padded network and pack
    every bias into its weight ref (3 m refs + n_phi phi refs total)."""
    H = 10 * m_layers
    Hp = ((H + 7) // 8) * 8                      # sublane-aligned hidden width
    Mp = ((m_layers + 7) // 8) * 8               # sublane-aligned output rows

    w1b = jnp.zeros((Hp, 3), jnp.float32)        # cols: [w1 | b1 | b2]
    w2bd = jnp.zeros((Hp, Hp), jnp.float32)      # block-diagonal second layer
    w3b = jnp.zeros((Mp, Hp + 1), jnp.float32)   # cols: [w3 | b3]
    for i, net in enumerate(params["m"]):
        (w1, b1), (w2, b2), (w3, b3) = net       # (1,10),(10,) (10,10),(10,) (10,1),(1,)
        lo = 10 * i
        w1b = w1b.at[lo:lo + 10, 0].set(w1[0, :])
        w1b = w1b.at[lo:lo + 10, 1].set(b1)
        w1b = w1b.at[lo:lo + 10, 2].set(b2)
        w2bd = w2bd.at[lo:lo + 10, lo:lo + 10].set(w2.T)   # torch W2 = stored.T
        w3b = w3b.at[i, lo:lo + 10].set(w3[:, 0])
        w3b = w3b.at[i, Hp].set(b3[0])
    m_packed = [w1b, w2bd, w3b]

    phi_packed = []
    if m_layers > 1:
        n_phi = len(phi_layers) - 1
        for j in range(n_phi):
            stacks = []
            for i in range(1, m_layers):
                w, b = params["phi"][i][j]                    # (in, out), (out,)
                stacks.append(jnp.concatenate([w, b.reshape(1, -1)], axis=0))
            phi_packed.append(jnp.stack(stacks, 0))           # (m-1, in+1, out)
    return m_packed, phi_packed, Hp, Mp


# ---------------------------------------------------------------------------
# Wrapper
# ---------------------------------------------------------------------------
def monotone_submodular_forward(x, params, phi_layers, m_layers, lamb, block_b=None):
    B, N = x.shape
    out_dim = phi_layers[-1] if m_layers > 1 else 1
    x = x.astype(jnp.float32)

    # Default: one grid step (no per-step overhead; best on single-TC v5e/v6e).
    # On v7x pass block_b = B // 2 so the length-2 "parallel" grid feeds both TCs.
    if block_b is None:
        block_b = B
    assert B % block_b == 0
    grid_n = B // block_b
    L = block_b * N                              # fused lane width per grid step

    m_packed, phi_packed, Hp, Mp = _pack_params(params, phi_layers, m_layers)
    n_phi = (len(phi_layers) - 1) if m_layers > 1 else 0
    phi_in_dims = tuple(phi_layers[:-1])

    # Flatten each batch tile to a single lane-dense row in the wrapper
    # (avoids any layout-hostile in-kernel reshape).
    x3 = x.reshape(grid_n, 1, L)
    # Constant block-of-ones segment matrix for the per-row set reduction.
    seg = (jnp.arange(L, dtype=jnp.int32)[None, :] // N
           == jnp.arange(block_b, dtype=jnp.int32)[:, None]).astype(jnp.float32)

    inputs = [x3, seg] + m_packed + phi_packed
    in_specs = [
        pl.BlockSpec((1, 1, L), lambda i: (i, 0, 0)),
        pl.BlockSpec((block_b, L), lambda i: (0, 0)),
    ]
    for arr in m_packed + phi_packed:
        in_specs.append(pl.BlockSpec(arr.shape, lambda i, nd=arr.ndim: (0,) * nd))
    out_specs = pl.BlockSpec((block_b, out_dim), lambda i: (i, 0))

    kernel = functools.partial(
        _monotone_submodular_kernel, m_layers, float(lamb), n_phi, phi_in_dims, Hp)

    return pl.pallas_call(
        kernel,
        out_shape=jax.ShapeDtypeStruct((B, out_dim), jnp.float32),
        grid=(grid_n,),
        in_specs=in_specs,
        out_specs=out_specs,
        compiler_params=pltpu.CompilerParams(dimension_semantics=("parallel",)),
    )(*inputs)


# ---------------------------------------------------------------------------
# Pure-JAX reference (mirrors the PyTorch module exactly)
# ---------------------------------------------------------------------------
def reference_forward(x, params, phi_layers, m_layers, lamb):
    bx = x[..., None]                            # (B, N, 1)

    def m_net(net, z):
        (w1, b1), (w2, b2), (w3, b3) = net
        h = jnp.maximum(z @ w1 + b1, 0.0)
        h = jnp.maximum(h @ w2 + b2, 0.0)
        h = h @ w3 + b3
        return jax.nn.softplus(h)

    ret = jnp.sum(m_net(params["m"][0], bx), axis=1)
    for i in range(1, m_layers):
        z = lamb * jnp.sum(m_net(params["m"][i], bx), axis=1) + (1.0 - lamb) * ret
        net = params["phi"][i]
        for (w, b) in net[:-1]:
            z = jnp.minimum(z @ w + b, 0.0)
        w, b = net[-1]
        ret = z @ w + b
    return ret


if __name__ == "__main__":
    phi_layers = [1, 32, 1]     # IncreasingConcaveNet dims (input/output are 1)
    m_layers = 3
    lamb = 0.5
    B, N = 16, 128              # x: (batch, set-size); one fused grid step

    key = jax.random.PRNGKey(0)
    k_x, k_p = jax.random.split(key)
    x = jax.random.normal(k_x, (B, N), jnp.float32)
    params = init_params(k_p, phi_layers, m_layers)

    out = monotone_submodular_forward(x, params, phi_layers, m_layers, lamb)
    out = jax.block_until_ready(out)

    ref = reference_forward(x, params, phi_layers, m_layers, lamb)
    assert out.shape == (B, phi_layers[-1])
    assert jnp.allclose(out, ref, atol=1e-3, rtol=1e-3), (out, ref)
    print("KERNEL_OK")
</pallas_src>

<mosaic_0001>
module attributes {stable_mosaic.version = 11 : i64} {
  func.func @_monotone_submodular_kernel(%arg0: i32, %arg1: memref<1x1x2048xf32, #tpu.memory_space<vmem>>, %arg2: memref<16x2048xf32, #tpu.memory_space<vmem>>, %arg3: memref<32x3xf32, #tpu.memory_space<vmem>>, %arg4: memref<32x32xf32, #tpu.memory_space<vmem>>, %arg5: memref<8x33xf32, #tpu.memory_space<vmem>>, %arg6: memref<2x2x32xf32, #tpu.memory_space<vmem>>, %arg7: memref<2x33x1xf32, #tpu.memory_space<vmem>>, %arg8: memref<16x1xf32, #tpu.memory_space<vmem>>) attributes {dimension_semantics = [#tpu.dimension_semantics<parallel>], iteration_bounds = array<i64: 1>, scalar_prefetch = 0 : i64, scratch_operands = 0 : i64, tpu.core_type = #tpu.core_type<tc>, window_params = [{transform_indices = @transform_0, window_bounds = array<i64: 1, 1, 2048>}, {pipeline_mode = #tpu.pipeline_mode<synchronous>, transform_indices = @transform_1, window_bounds = array<i64: 16, 2048>}, {pipeline_mode = #tpu.pipeline_mode<synchronous>, transform_indices = @transform_2, window_bounds = array<i64: 32, 3>}, {pipeline_mode = #tpu.pipeline_mode<synchronous>, transform_indices = @transform_3, window_bounds = array<i64: 32, 32>}, {pipeline_mode = #tpu.pipeline_mode<synchronous>, transform_indices = @transform_4, window_bounds = array<i64: 8, 33>}, {pipeline_mode = #tpu.pipeline_mode<synchronous>, transform_indices = @transform_5, window_bounds = array<i64: 2, 2, 32>}, {pipeline_mode = #tpu.pipeline_mode<synchronous>, transform_indices = @transform_6, window_bounds = array<i64: 2, 33, 1>}, {transform_indices = @transform_7, window_bounds = array<i64: 16, 1>}]} {
    %c0 = arith.constant 0 : index
    %c0_0 = arith.constant 0 : index
    %c0_1 = arith.constant 0 : index
    %0 = vector.load %arg1[%c0, %c0_0, %c0_1] : memref<1x1x2048xf32, #tpu.memory_space<vmem>>, vector<1x1x2048xf32>
    %1 = vector.shape_cast %0 : vector<1x1x2048xf32> to vector<1x2048xf32>
    %c0_2 = arith.constant 0 : index
    %c0_3 = arith.constant 0 : index
    %2 = vector.load %arg3[%c0_2, %c0_3] : memref<32x3xf32, #tpu.memory_space<vmem>>, vector<32x1xf32>
    %c0_4 = arith.constant 0 : index
    %c1 = arith.constant 1 : index
    %3 = vector.load %arg3[%c0_4, %c1] : memref<32x3xf32, #tpu.memory_space<vmem>>, vector<32x1xf32>
    %c0_5 = arith.constant 0 : index
    %c2 = arith.constant 2 : index
    %4 = vector.load %arg3[%c0_5, %c2] : memref<32x3xf32, #tpu.memory_space<vmem>>, vector<32x1xf32>
    %c0_6 = arith.constant 0 : index
    %c0_7 = arith.constant 0 : index
    %5 = vector.load %arg4[%c0_6, %c0_7] : memref<32x32xf32, #tpu.memory_space<vmem>>, vector<32x32xf32>
    %c0_8 = arith.constant 0 : index
    %c0_9 = arith.constant 0 : index
    %6 = vector.load %arg5[%c0_8, %c0_9] : memref<8x33xf32, #tpu.memory_space<vmem>>, vector<8x32xf32>
    %c0_10 = arith.constant 0 : index
    %c32 = arith.constant 32 : index
    %7 = vector.load %arg5[%c0_10, %c32] : memref<8x33xf32, #tpu.memory_space<vmem>>, vector<8x1xf32>
    %8 = vector.broadcast %1 : vector<1x2048xf32> to vector<32x2048xf32>
    %9 = vector.broadcast %2 : vector<32x1xf32> to vector<32x2048xf32>
    %10 = arith.mulf %8, %9 : vector<32x2048xf32>
    %11 = vector.broadcast %3 : vector<32x1xf32> to vector<32x2048xf32>
    %12 = arith.addf %10, %11 : vector<32x2048xf32>
    %cst = arith.constant 0.000000e+00 : f32
    %13 = vector.broadcast %cst : f32 to vector<32x2048xf32>
    %14 = arith.maximumf %12, %13 : vector<32x2048xf32>
    %cst_11 = arith.constant dense<0.000000e+00> : vector<32x2048xf32>
    %15 = tpu.matmul %5, %14, %cst_11 {dimension_numbers = #tpu.dot_dimension_numbers<[1], [0], [0], [1], [0, 0, 1, 1], [], []>} : vector<32x32xf32>, vector<32x2048xf32>, vector<32x2048xf32> -> vector<32x2048xf32>
    %16 = vector.broadcast %4 : vector<32x1xf32> to vector<32x2048xf32>
    %17 = arith.addf %15, %16 : vector<32x2048xf32>
    %cst_12 = arith.constant 0.000000e+00 : f32
    %18 = vector.broadcast %cst_12 : f32 to vector<32x2048xf32>
    %19 = arith.maximumf %17, %18 : vector<32x2048xf32>
    %cst_13 = arith.constant dense<0.000000e+00> : vector<8x2048xf32>
    %20 = tpu.matmul %6, %19, %cst_13 {dimension_numbers = #tpu.dot_dimension_numbers<[1], [0], [0], [1], [0, 0, 1, 1], [], []>} : vector<8x32xf32>, vector<32x2048xf32>, vector<8x2048xf32> -> vector<8x2048xf32>
    %21 = vector.broadcast %7 : vector<8x1xf32> to vector<8x2048xf32>
    %22 = arith.addf %20, %21 : vector<8x2048xf32>
    %cst_14 = arith.constant 0.000000e+00 : f32
    %23 = vector.broadcast %cst_14 : f32 to vector<8x2048xf32>
    %24 = arith.maximumf %22, %23 : vector<8x2048xf32>
    %25 = math.absf %22 : vector<8x2048xf32>
    %cst_15 = arith.constant 0.000000e+00 : f32
    %26 = vector.broadcast %cst_15 : f32 to vector<8x2048xf32>
    %27 = arith.subf %26, %25 : vector<8x2048xf32>
    %28 = math.exp %27 : vector<8x2048xf32>
    %cst_16 = arith.constant 1.000000e+00 : f32
    %29 = vector.broadcast %cst_16 : f32 to vector<8x2048xf32>
    %30 = arith.addf %29, %28 : vector<8x2048xf32>
    %31 = math.log %30 : vector<8x2048xf32>
    %32 = arith.addf %24, %31 : vector<8x2048xf32>
    %c0_17 = arith.constant 0 : index
    %c0_18 = arith.constant 0 : index
    %33 = vector.load %arg2[%c0_17, %c0_18] : memref<16x2048xf32, #tpu.memory_space<vmem>>, vector<16x2048xf32>
    %cst_19 = arith.constant dense<0.000000e+00> : vector<16x8xf32>
    %34 = tpu.matmul %33, %32, %cst_19 {dimension_numbers = #tpu.dot_dimension_numbers<[1], [1], [0], [0], [0, 0, 1, 0], [], []>} : vector<16x2048xf32>, vector<8x2048xf32>, vector<16x8xf32> -> vector<16x8xf32>
    %35 = vector.extract_strided_slice %34 {offsets = [0, 0], sizes = [16, 1], strides = [1, 1]} : vector<16x8xf32> to vector<16x1xf32>
    %36 = vector.extract_strided_slice %34 {offsets = [0, 1], sizes = [16, 1], strides = [1, 1]} : vector<16x8xf32> to vector<16x1xf32>
    %cst_20 = arith.constant 5.000000e-01 : f32
    %37 = vector.broadcast %cst_20 : f32 to vector<16x1xf32>
    %38 = arith.mulf %37, %36 : vector<16x1xf32>
    %cst_21 = arith.constant 5.000000e-01 : f32
    %39 = vector.broadcast %cst_21 : f32 to vector<16x1xf32>
    %40 = arith.mulf %39, %35 : vector<16x1xf32>
    %41 = arith.addf %38, %40 : vector<16x1xf32>
    %c0_22 = arith.constant 0 : index
    %c0_23 = arith.constant 0 : index
    %c0_24 = arith.constant 0 : index
    %42 = vector.load %arg6[%c0_22, %c0_23, %c0_24] : memref<2x2x32xf32, #tpu.memory_space<vmem>>, vector<1x2x32xf32>
    %43 = vector.shape_cast %42 : vector<1x2x32xf32> to vector<2x32xf32>
    %44 = vector.extract_strided_slice %43 {offsets = [0, 0], sizes = [1, 32], strides = [1, 1]} : vector<2x32xf32> to vector<1x32xf32>
    %45 = vector.extract_strided_slice %43 {offsets = [1, 0], sizes = [1, 32], strides = [1, 1]} : vector<2x32xf32> to vector<1x32xf32>
    %46 = vector.broadcast %41 : vector<16x1xf32> to vector<16x32xf32>
    %47 = vector.broadcast %44 : vector<1x32xf32> to vector<16x32xf32>
    %48 = arith.mulf %46, %47 : vector<16x32xf32>
    %49 = vector.broadcast %45 : vector<1x32xf32> to vector<16x32xf32>
    %50 = arith.addf %48, %49 : vector<16x32xf32>
    %cst_25 = arith.constant 0.000000e+00 : f32
    %51 = vector.broadcast %cst_25 : f32 to vector<16x32xf32>
    %52 = arith.minimumf %50, %51 : vector<16x32xf32>
    %c0_26 = arith.constant 0 : index
    %c0_27 = arith.constant 0 : index
    %c0_28 = arith.constant 0 : index
    %53 = vector.load %arg7[%c0_26, %c0_27, %c0_28] : memref<2x33x1xf32, #tpu.memory_space<vmem>>, vector<1x33x1xf32>
    %54 = vector.shape_cast %53 : vector<1x33x1xf32> to vector<33x1xf32>
    %55 = vector.extract_strided_slice %54 {offsets = [0, 0], sizes = [32, 1], strides = [1, 1]} : vector<33x1xf32> to vector<32x1xf32>
    %56 = vector.extract_strided_slice %54 {offsets = [32, 0], sizes = [1, 1], strides = [1, 1]} : vector<33x1xf32> to vector<1x1xf32>
    %cst_29 = arith.constant dense<0.000000e+00> : vector<16x1xf32>
    %57 = tpu.matmul %52, %55, %cst_29 {dimension_numbers = #tpu.dot_dimension_numbers<[1], [0], [0], [1], [0, 0, 1, 1], [], []>} : vector<16x32xf32>, vector<32x1xf32>, vector<16x1xf32> -> vector<16x1xf32>
    %58 = vector.broadcast %56 : vector<1x1xf32> to vector<16x1xf32>
    %59 = arith.addf %57, %58 : vector<16x1xf32>
    %60 = vector.extract_strided_slice %34 {offsets = [0, 2], sizes = [16, 1], strides = [1, 1]} : vector<16x8xf32> to vector<16x1xf32>
    %cst_30 = arith.constant 5.000000e-01 : f32
    %61 = vector.broadcast %cst_30 : f32 to vector<16x1xf32>
    %62 = arith.mulf %61, %60 : vector<16x1xf32>
    %cst_31 = arith.constant 5.000000e-01 : f32
    %63 = vector.broadcast %cst_31 : f32 to vector<16x1xf32>
    %64 = arith.mulf %63, %59 : vector<16x1xf32>
    %65 = arith.addf %62, %64 : vector<16x1xf32>
    %c1_32 = arith.constant 1 : index
    %c0_33 = arith.constant 0 : index
    %c0_34 = arith.constant 0 : index
    %66 = vector.load %arg6[%c1_32, %c0_33, %c0_34] : memref<2x2x32xf32, #tpu.memory_space<vmem>>, vector<1x2x32xf32>
    %67 = vector.shape_cast %66 : vector<1x2x32xf32> to vector<2x32xf32>
    %68 = vector.extract_strided_slice %67 {offsets = [0, 0], sizes = [1, 32], strides = [1, 1]} : vector<2x32xf32> to vector<1x32xf32>
    %69 = vector.extract_strided_slice %67 {offsets = [1, 0], sizes = [1, 32], strides = [1, 1]} : vector<2x32xf32> to vector<1x32xf32>
    %70 = vector.broadcast %65 : vector<16x1xf32> to vector<16x32xf32>
    %71 = vector.broadcast %68 : vector<1x32xf32> to vector<16x32xf32>
    %72 = arith.mulf %70, %71 : vector<16x32xf32>
    %73 = vector.broadcast %69 : vector<1x32xf32> to vector<16x32xf32>
    %74 = arith.addf %72, %73 : vector<16x32xf32>
    %cst_35 = arith.constant 0.000000e+00 : f32
    %75 = vector.broadcast %cst_35 : f32 to vector<16x32xf32>
    %76 = arith.minimumf %74, %75 : vector<16x32xf32>
    %c1_36 = arith.constant 1 : index
    %c0_37 = arith.constant 0 : index
    %c0_38 = arith.constant 0 : index
    %77 = vector.load %arg7[%c1_36, %c0_37, %c0_38] : memref<2x33x1xf32, #tpu.memory_space<vmem>>, vector<1x33x1xf32>
    %78 = vector.shape_cast %77 : vector<1x33x1xf32> to vector<33x1xf32>
    %79 = vector.extract_strided_slice %78 {offsets = [0, 0], sizes = [32, 1], strides = [1, 1]} : vector<33x1xf32> to vector<32x1xf32>
    %80 = vector.extract_strided_slice %78 {offsets = [32, 0], sizes = [1, 1], strides = [1, 1]} : vector<33x1xf32> to vector<1x1xf32>
    %cst_39 = arith.constant dense<0.000000e+00> : vector<16x1xf32>
    %81 = tpu.matmul %76, %79, %cst_39 {dimension_numbers = #tpu.dot_dimension_numbers<[1], [0], [0], [1], [0, 0, 1, 1], [], []>} : vector<16x32xf32>, vector<32x1xf32>, vector<16x1xf32> -> vector<16x1xf32>
    %82 = vector.broadcast %80 : vector<1x1xf32> to vector<16x1xf32>
    %83 = arith.addf %81, %82 : vector<16x1xf32>
    %c0_40 = arith.constant 0 : index
    %c0_41 = arith.constant 0 : index
    %84 = vector.load %arg8[%c0_40, %c0_41] : memref<16x1xf32, #tpu.memory_space<vmem>>, vector<16x1xf32>
    tpu.vector_store %arg8[%c0_40, %c0_41], %83 {strides = array<i32>} : memref<16x1xf32, #tpu.memory_space<vmem>>, vector<16x1xf32>,
    return
  }
  func.func @transform_0(%arg0: i32) -> (i32, i32, i32) {
    %c0_i32 = arith.constant 0 : i32
    %c0_i32_0 = arith.constant 0 : i32
    %c0_i32_1 = arith.constant 0 : i32
    return %arg0, %c0_i32, %c0_i32_0 : i32, i32, i32
  }
  func.func @transform_1(%arg0: i32) -> (i32, i32) {
    %c0_i32 = arith.constant 0 : i32
    %c0_i32_0 = arith.constant 0 : i32
    %c0_i32_1 = arith.constant 0 : i32
    return %c0_i32, %c0_i32_0 : i32, i32
  }
  func.func @transform_2(%arg0: i32) -> (i32, i32) {
    %c0_i32 = arith.constant 0 : i32
    %c0_i32_0 = arith.constant 0 : i32
    %c0_i32_1 = arith.constant 0 : i32
    return %c0_i32, %c0_i32_0 : i32, i32
  }
  func.func @transform_3(%arg0: i32) -> (i32, i32) {
    %c0_i32 = arith.constant 0 : i32
    %c0_i32_0 = arith.constant 0 : i32
    %c0_i32_1 = arith.constant 0 : i32
    return %c0_i32, %c0_i32_0 : i32, i32
  }
  func.func @transform_4(%arg0: i32) -> (i32, i32) {
    %c0_i32 = arith.constant 0 : i32
    %c0_i32_0 = arith.constant 0 : i32
    %c0_i32_1 = arith.constant 0 : i32
    return %c0_i32, %c0_i32_0 : i32, i32
  }
  func.func @transform_5(%arg0: i32) -> (i32, i32, i32) {
    %c0_i32 = arith.constant 0 : i32
    %c0_i32_0 = arith.constant 0 : i32
    %c0_i32_1 = arith.constant 0 : i32
    %c0_i32_2 = arith.constant 0 : i32
    return %c0_i32, %c0_i32_0, %c0_i32_1 : i32, i32, i32
  }
  func.func @transform_6(%arg0: i32) -> (i32, i32, i32) {
    %c0_i32 = arith.constant 0 : i32
    %c0_i32_0 = arith.constant 0 : i32
    %c0_i32_1 = arith.constant 0 : i32
    %c0_i32_2 = arith.constant 0 : i32
    return %c0_i32, %c0_i32_0, %c0_i32_1 : i32, i32, i32
  }
  func.func @transform_7(%arg0: i32) -> (i32, i32) {
    %c0_i32 = arith.constant 0 : i32
    %c0_i32_0 = arith.constant 0 : i32
    return %arg0, %c0_i32 : i32, i32
  }
}

</mosaic_0001>

<llo_original>
// kernel: tpu_custom_call.1
$region0: #{tpu_custom_call.1}
  #allocation0 [shape = 'u32[]', space=smem, size = 0x4, offset = 0x4, fixed_abs, tag = 'smem constant byte address 0x4 - core index']
  #allocation1 [shape = 'u32[72,128]{1,0:T(1,128)}', space=vmem, size = 0x9000, scoped, tag = 'internal scratch']
  %s0 = inlined_call_operand.vmem [shape: f32[1,1,2048], index: 0, kind: input, shape index: {}]
  %s1 = inlined_call_operand.hbm [shape: f32[16,2048], index: 1, kind: input, shape index: {}]
  %s2 = inlined_call_operand.vmem [shape: f32[32,3], index: 2, kind: input, shape index: {}]
  %s3 = inlined_call_operand.vmem [shape: f32[32,32], index: 3, kind: input, shape index: {}]
  %s4 = inlined_call_operand.vmem [shape: f32[8,33], index: 4, kind: input, shape index: {}]
  %s5 = inlined_call_operand.vmem [shape: f32[2,2,32], index: 5, kind: input, shape index: {}]
  %s6 = inlined_call_operand.vmem [shape: f32[2,33,1], index: 6, kind: input, shape index: {}]
  %s7 = inlined_call_operand.vmem [shape: f32[16,1], index: 7, kind: output, shape index: {}]
  %s8 = sld [smem:[#allocation0]]
  $region42: #{tpu_custom_call.1} parent=0
    _
  %s10 = ssub.s32 1, %s8
  %s11 = scalar_select 0, %s10, %s8
  $region1: #{tpu_custom_call.1} parent=0
    #allocation2 [shape = 'u8[131072]{0}', space=vmem, size = 0x20000, scoped, tag = 'input window, operand 1, single buffered']
    #allocation3 [shape = 's32[1]{0}', space=sflag, size = 0x4, scoped, tag = 'scoped memory for tpu_custom_call.1']
    %12 = vsyncpa [#allocation3], 0
    // Predicated region
    $region2: #{tpu_custom_call.1} parent=1 // pred_check
      _
    $region3: #{tpu_custom_call.1} parent=1 // pred_check_branch
      %14 = sbr.rel (0) target = $region5
    $region4: #{tpu_custom_call.1} parent=1 // pred_region
      _
    $region5: #{tpu_custom_call.1} parent=1 // pred_fallthru
      _
    // Predicated region
    $region6: #{tpu_custom_call.1} parent=1 // pred_check
      _
    $region7: #{tpu_custom_call.1} parent=1 // pred_check_branch
      %16 = sbr.rel (0) target = $region9
    $region8: #{tpu_custom_call.1} parent=1 // pred_region
      %18 = vsyncadd [#allocation3], 0
      %s19 = sshll.u32 %s1, 4
      %s20 = int_to_ptr.hbm [resolvable:$true] %s19
      %s21 = sshll.u32 [#allocation2], 4
      %s22 = int_to_ptr.vmem [resolvable:$true] %s21
      %27 = dma.hbm_to_vmem [thread:$0]  %s20, 4096, %s22, [#allocation3], 2048, 2048, 128
    $region9: #{tpu_custom_call.1} parent=1 // pred_fallthru
      _
    // Predicated region
    $region10: #{tpu_custom_call.1} parent=1 // pred_check
      _
    $region11: #{tpu_custom_call.1} parent=1 // pred_check_branch
      %29 = sbr.rel (0) target = $region13
    $region12: #{tpu_custom_call.1} parent=1 // pred_region
      _
    $region13: #{tpu_custom_call.1} parent=1 // pred_fallthru
      _
    // Predicated region
    $region14: #{tpu_custom_call.1} parent=1 // pred_check
      _
    $region15: #{tpu_custom_call.1} parent=1 // pred_check_branch
      %31 = sbr.rel (0) target = $region17
    $region16: #{tpu_custom_call.1} parent=1 // pred_region
      _
    $region17: #{tpu_custom_call.1} parent=1 // pred_fallthru
      _
    // Predicated region
    $region18: #{tpu_custom_call.1} parent=1 // pred_check
      _
    $region19: #{tpu_custom_call.1} parent=1 // pred_check_branch
      %33 = sbr.rel (0) target = $region21
    $region20: #{tpu_custom_call.1} parent=1 // pred_region
      _
    $region21: #{tpu_custom_call.1} parent=1 // pred_fallthru
      _
    // Predicated region
    $region22: #{tpu_custom_call.1} parent=1 // pred_check
      _
    $region23: #{tpu_custom_call.1} parent=1 // pred_check_branch
      %35 = sbr.rel (0) target = $region25
    $region24: #{tpu_custom_call.1} parent=1 // pred_region
      _
    $region25: #{tpu_custom_call.1} parent=1 // pred_fallthru
      _
    // Predicated region
    $region26: #{tpu_custom_call.1} parent=1 // pred_check
      _
    $region27: #{tpu_custom_call.1} parent=1 // pred_check_branch
      %37 = sbr.rel (0) target = $region29
    $region28: #{tpu_custom_call.1} parent=1 // pred_region
      _
    $region29: #{tpu_custom_call.1} parent=1 // pred_fallthru
      _
    // Predicated region
    $region30: #{tpu_custom_call.1} parent=1 // pred_check
      _
    $region31: #{tpu_custom_call.1} parent=1 // pred_check_branch
      %39 = sbr.rel (0) target = $region33
    $region32: #{tpu_custom_call.1} parent=1 // pred_region
      %41 = dma.done [#allocation3], 4096
    $region33: #{tpu_custom_call.1} parent=1 // pred_fallthru
      _
    %v42 = vld [vmem:[%s0] sm:$0xff]
    %v43 = vld [vmem:[%s0 + $0x8] sm:$0xff]
    %v44 = vld [vmem:[%s2] sm:$0xff]
    %v45 = vld [vmem:[%s2 + $0x8] sm:$0xff]
    %v46 = vld [vmem:[%s2 + $0x10] sm:$0xff]
    %v47 = vld [vmem:[%s2 + $0x18] sm:$0xff]
    %v48 = vld [vmem:[%s3] sm:$0xff]
    %v49 = vld [vmem:[%s3 + $0x8] sm:$0xff]
    %v50 = vld [vmem:[%s3 + $0x10] sm:$0xff]
    %v51 = vld [vmem:[%s3 + $0x18] sm:$0xff]
    %v52 = vld [vmem:[%s4] sm:$0xff]
    %v55 = vperm.slane %v42, 0
    %v56 = vperm.slane %v42, 1
    %v57 = vperm.slane %v42, 2
    %v58 = vperm.slane %v42, 3
    %v59 = vperm.slane %v42, 4
    %v60 = vperm.slane %v42, 5
    %v61 = vperm.slane %v42, 6
    %v62 = vperm.slane %v42, 7
    %v63 = vperm.slane %v43, 0
    %v64 = vperm.slane %v43, 1
    %v65 = vperm.slane %v43, 2
    %v66 = vperm.slane %v43, 3
    %v67 = vperm.slane %v43, 4
    %v68 = vperm.slane %v43, 5
    %v69 = vperm.slane %v43, 6
    %v70 = vperm.slane %v43, 7
    %88 = vset.pattern.permute.xlu0 0
    %89 = vperm.xlu0 %88, %v44
    %v90 = vpop.permute.xlu0 %89
    %93 = vset.pattern.permute.xlu0 0
    %94 = vperm.xlu0 %93, %v45
    %v95 = vpop.permute.xlu0 %94
    %98 = vset.pattern.permute.xlu0 0
    %99 = vperm.xlu0 %98, %v46
    %v100 = vpop.permute.xlu0 %99
    %103 = vset.pattern.permute.xlu0 0
    %104 = vperm.xlu0 %103, %v47
    %v105 = vpop.permute.xlu0 %104
    %v107 = vmul.f32 %v55, %v90
    %v108 = vmul.f32 %v56, %v90
    %v109 = vmul.f32 %v57, %v90
    %v110 = vmul.f32 %v58, %v90
    %v111 = vmul.f32 %v59, %v90
    %v112 = vmul.f32 %v60, %v90
    %v113 = vmul.f32 %v61, %v90
    %v114 = vmul.f32 %v62, %v90
    %v115 = vmul.f32 %v63, %v90
    %v116 = vmul.f32 %v64, %v90
    %v117 = vmul.f32 %v65, %v90
    %v118 = vmul.f32 %v66, %v90
    %v119 = vmul.f32 %v67, %v90
    %v120 = vmul.f32 %v68, %v90
    %v121 = vmul.f32 %v69, %v90
    %v122 = vmul.f32 %v70, %v90
    %v123 = vmul.f32 %v55, %v95
    %v124 = vmul.f32 %v56, %v95
    %v125 = vmul.f32 %v57, %v95
    %v126 = vmul.f32 %v58, %v95
    %v127 = vmul.f32 %v59, %v95
    %v128 = vmul.f32 %v60, %v95
    %v129 = vmul.f32 %v61, %v95
    %v130 = vmul.f32 %v62, %v95
    %v131 = vmul.f32 %v63, %v95
    %v132 = vmul.f32 %v64, %v95
    %v133 = vmul.f32 %v65, %v95
    %v134 = vmul.f32 %v66, %v95
    %v135 = vmul.f32 %v67, %v95
    %v136 = vmul.f32 %v68, %v95
    %v137 = vmul.f32 %v69, %v95
    %v138 = vmul.f32 %v70, %v95
    %v139 = vmul.f32 %v55, %v100
    %v140 = vmul.f32 %v56, %v100
    %v141 = vmul.f32 %v57, %v100
    %v142 = vmul.f32 %v58, %v100
    %v143 = vmul.f32 %v59, %v100
    %v144 = vmul.f32 %v60, %v100
    %v145 = vmul.f32 %v61, %v100
    %v146 = vmul.f32 %v62, %v100
    %v147 = vmul.f32 %v63, %v100
    %v148 = vmul.f32 %v64, %v100
    %v149 = vmul.f32 %v65, %v100
    %v150 = vmul.f32 %v66, %v100
    %v151 = vmul.f32 %v67, %v100
    %v152 = vmul.f32 %v68, %v100
    %v153 = vmul.f32 %v69, %v100
    %v154 = vmul.f32 %v70, %v100
    %v155 = vmul.f32 %v55, %v105
    %v156 = vmul.f32 %v56, %v105
    %v157 = vmul.f32 %v57, %v105
    %v158 = vmul.f32 %v58, %v105
    %v159 = vmul.f32 %v59, %v105
    %v160 = vmul.f32 %v60, %v105
    %v161 = vmul.f32 %v61, %v105
    %v162 = vmul.f32 %v62, %v105
    %v163 = vmul.f32 %v63, %v105
    %v164 = vmul.f32 %v64, %v105
    %v165 = vmul.f32 %v65, %v105
    %v166 = vmul.f32 %v66, %v105
    %v167 = vmul.f32 %v67, %v105
    %v168 = vmul.f32 %v68, %v105
    %v169 = vmul.f32 %v69, %v105
    %v170 = vmul.f32 %v70, %v105
    %171 = vset.pattern.permute.xlu0 1
    %172 = vperm.xlu0 %171, %v44
    %v173 = vpop.permute.xlu0 %172
    %175 = vset.pattern.permute.xlu0 1
    %176 = vperm.xlu0 %175, %v45
    %v177 = vpop.permute.xlu0 %176
    %179 = vset.pattern.permute.xlu0 1
    %180 = vperm.xlu0 %179, %v46
    %v181 = vpop.permute.xlu0 %180
    %183 = vset.pattern.permute.xlu0 1
    %184 = vperm.xlu0 %183, %v47
    %v185 = vpop.permute.xlu0 %184
    %v187 = vadd.f32 %v107, %v173
    %v188 = vadd.f32 %v108, %v173
    %v189 = vadd.f32 %v109, %v173
    %v190 = vadd.f32 %v110, %v173
    %v191 = vadd.f32 %v111, %v173
    %v192 = vadd.f32 %v112, %v173
    %v193 = vadd.f32 %v113, %v173
    %v194 = vadd.f32 %v114, %v173
    %v195 = vadd.f32 %v115, %v173
    %v196 = vadd.f32 %v116, %v173
    %v197 = vadd.f32 %v117, %v173
    %v198 = vadd.f32 %v118, %v173
    %v199 = vadd.f32 %v119, %v173
    %v200 = vadd.f32 %v120, %v173
    %v201 = vadd.f32 %v121, %v173
    %v202 = vadd.f32 %v122, %v173
    %v203 = vadd.f32 %v123, %v177
    %v204 = vadd.f32 %v124, %v177
    %v205 = vadd.f32 %v125, %v177
    %v206 = vadd.f32 %v126, %v177
    %v207 = vadd.f32 %v127, %v177
    %v208 = vadd.f32 %v128, %v177
    %v209 = vadd.f32 %v129, %v177
    %v210 = vadd.f32 %v130, %v177
    %v211 = vadd.f32 %v131, %v177
    %v212 = vadd.f32 %v132, %v177
    %v213 = vadd.f32 %v133, %v177
    %v214 = vadd.f32 %v134, %v177
    %v215 = vadd.f32 %v135, %v177
    %v216 = vadd.f32 %v136, %v177
    %v217 = vadd.f32 %v137, %v177
    %v218 = vadd.f32 %v138, %v177
    %v219 = vadd.f32 %v139, %v181
    %v220 = vadd.f32 %v140, %v181
    %v221 = vadd.f32 %v141, %v181
    %v222 = vadd.f32 %v142, %v181
    %v223 = vadd.f32 %v143, %v181
    %v224 = vadd.f32 %v144, %v181
    %v225 = vadd.f32 %v145, %v181
    %v226 = vadd.f32 %v146, %v181
    %v227 = vadd.f32 %v147, %v181
    %v228 = vadd.f32 %v148, %v181
    %v229 = vadd.f32 %v149, %v181
    %v230 = vadd.f32 %v150, %v181
    %v231 = vadd.f32 %v151, %v181
    %v232 = vadd.f32 %v152, %v181
    %v233 = vadd.f32 %v153, %v181
    %v234 = vadd.f32 %v154, %v181
    %v235 = vadd.f32 %v155, %v185
    %v236 = vadd.f32 %v156, %v185
    %v237 = vadd.f32 %v157, %v185
    %v238 = vadd.f32 %v158, %v185
    %v239 = vadd.f32 %v159, %v185
    %v240 = vadd.f32 %v160, %v185
    %v241 = vadd.f32 %v161, %v185
    %v242 = vadd.f32 %v162, %v185
    %v243 = vadd.f32 %v163, %v185
    %v244 = vadd.f32 %v164, %v185
    %v245 = vadd.f32 %v165, %v185
    %v246 = vadd.f32 %v166, %v185
    %v247 = vadd.f32 %v167, %v185
    %v248 = vadd.f32 %v168, %v185
    %v249 = vadd.f32 %v169, %v185
    %v250 = vadd.f32 %v170, %v185
    %v251 = vmax.f32 %v187, 0.0
    %v252 = vmax.f32 %v188, 0.0
    %v253 = vmax.f32 %v189, 0.0
    %v254 = vmax.f32 %v190, 0.0
    %v255 = vmax.f32 %v191, 0.0
    %v256 = vmax.f32 %v192, 0.0
    %v257 = vmax.f32 %v193, 0.0
    %v258 = vmax.f32 %v194, 0.0
    %v259 = vmax.f32 %v195, 0.0
    %v260 = vmax.f32 %v196, 0.0
    %v261 = vmax.f32 %v197, 0.0
    %v262 = vmax.f32 %v198, 0.0
    %v263 = vmax.f32 %v199, 0.0
    %v264 = vmax.f32 %v200, 0.0
    %v265 = vmax.f32 %v201, 0.0
    %v266 = vmax.f32 %v202, 0.0
    %v267 = vmax.f32 %v203, 0.0
    %v268 = vmax.f32 %v204, 0.0
    %v269 = vmax.f32 %v205, 0.0
    %v270 = vmax.f32 %v206, 0.0
    %v271 = vmax.f32 %v207, 0.0
    %v272 = vmax.f32 %v208, 0.0
    %v273 = vmax.f32 %v209, 0.0
    %v274 = vmax.f32 %v210, 0.0
    %v275 = vmax.f32 %v211, 0.0
    %v276 = vmax.f32 %v212, 0.0
    %v277 = vmax.f32 %v213, 0.0
    %v278 = vmax.f32 %v214, 0.0
    %v279 = vmax.f32 %v215, 0.0
    %v280 = vmax.f32 %v216, 0.0
    %v281 = vmax.f32 %v217, 0.0
    %v282 = vmax.f32 %v218, 0.0
    %v283 = vmax.f32 %v219, 0.0
    %v284 = vmax.f32 %v220, 0.0
    %v285 = vmax.f32 %v221, 0.0
    %v286 = vmax.f32 %v222, 0.0
    %v287 = vmax.f32 %v223, 0.0
    %v288 = vmax.f32 %v224, 0.0
    %v289 = vmax.f32 %v225, 0.0
    %v290 = vmax.f32 %v226, 0.0
    %v291 = vmax.f32 %v227, 0.0
    %v292 = vmax.f32 %v228, 0.0
    %v293 = vmax.f32 %v229, 0.0
    %v294 = vmax.f32 %v230, 0.0
    %v295 = vmax.f32 %v231, 0.0
    %v296 = vmax.f32 %v232, 0.0
    %v297 = vmax.f32 %v233, 0.0
    %v298 = vmax.f32 %v234, 0.0
    %v299 = vmax.f32 %v235, 0.0
    %v300 = vmax.f32 %v236, 0.0
    %v301 = vmax.f32 %v237, 0.0
    %v302 = vmax.f32 %v238, 0.0
    %v303 = vmax.f32 %v239, 0.0
    %v304 = vmax.f32 %v240, 0.0
    %v305 = vmax.f32 %v241, 0.0
    %v306 = vmax.f32 %v242, 0.0
    %v307 = vmax.f32 %v243, 0.0
    %v308 = vmax.f32 %v244, 0.0
    %v309 = vmax.f32 %v245, 0.0
    %v310 = vmax.f32 %v246, 0.0
    %v311 = vmax.f32 %v247, 0.0
    %v312 = vmax.f32 %v248, 0.0
    %v313 = vmax.f32 %v249, 0.0
    %v314 = vmax.f32 %v250, 0.0
    %315 = vset.pattern.permute.xlu0 2
    %316 = vperm.xlu0 %315, %v44
    %v317 = vpop.permute.xlu0 %316
    %319 = vset.pattern.permute.xlu0 2
    %320 = vperm.xlu0 %319, %v45
    %v321 = vpop.permute.xlu0 %320
    %323 = vset.pattern.permute.xlu0 2
    %324 = vperm.xlu0 %323, %v46
    %v325 = vpop.permute.xlu0 %324
    %327 = vset.pattern.permute.xlu0 2
    %328 = vperm.xlu0 %327, %v47
    %v329 = vpop.permute.xlu0 %328
    %vm331 = vcmask 261120
    %v333 = vsel %vm331, %v48, 0
    %v336 = vsel %vm331, %v49, 0
    %v339 = vsel %vm331, %v50, 0
    %v342 = vsel %vm331, %v51, 0
    %344 = vmatpush.msra.mxu0 0.0
    %345 = vmatpush.msra.mxu0 0.0
    %346 = vmatpush.msra.mxu0 0.0
    %347 = vmatpush.msra.mxu0 0.0
    %348 = vmatpush.msra.mxu0 0.0
    %349 = vmatpush.msra.mxu0 0.0
    %350 = vmatpush.msra.mxu0 0.0
    %351 = vmatpush.msra.mxu0 0.0
    %352 = vmatpush.msra.mxu0 0.0
    %353 = vmatpush.msra.mxu0 0.0
    %354 = vmatpush.msra.mxu0 0.0
    %355 = vmatpush.msra.mxu0 0.0
    %356 = vmatpush.msra.mxu0 %v299
    %357 = vmatpush.msra.mxu0 %v283
    %358 = vmatpush.msra.mxu0 %v267
    %359 = vmatpush.msra.mxu0 %v251
    %360 = vmatmul.f32.gmra.mxu0 %v333
    %v361 = vpop.f32.mrf.mxu0
    %v362 = vadd.f32 %v317, %v361
    %363 = vmatmul.f32.gmra.mxu0 %v336
    %v364 = vpop.f32.mrf.mxu0
    %v365 = vadd.f32 %v321, %v364
    %366 = vmatmul.f32.gmra.mxu0 %v339
    %v367 = vpop.f32.mrf.mxu0
    %v368 = vadd.f32 %v325, %v367
    %369 = vmatmul.f32.gmra.mxu0 %v342
    %v370 = vpop.f32.mrf.mxu0
    %v371 = vadd.f32 %v329, %v370
    %372 = vdwg.mxu0
    %373 = vmatpush.msra.mxu0 0.0
    %374 = vmatpush.msra.mxu0 0.0
    %375 = vmatpush.msra.mxu0 0.0
    %376 = vmatpush.msra.mxu0 0.0
    %377 = vmatpush.msra.mxu0 0.0
    %378 = vmatpush.msra.mxu0 0.0
    %379 = vmatpush.msra.mxu0 0.0
    %380 = vmatpush.msra.mxu0 0.0
    %381 = vmatpush.msra.mxu0 0.0
    %382 = vmatpush.msra.mxu0 0.0
    %383 = vmatpush.msra.mxu0 0.0
    %384 = vmatpush.msra.mxu0 0.0
    %385 = vmatpush.msra.mxu0 %v300
    %386 = vmatpush.msra.mxu0 %v284
    %387 = vmatpush.msra.mxu0 %v268
    %388 = vmatpush.msra.mxu0 %v252
    %389 = vmatmul.f32.gmra.mxu0 %v333
    %v390 = vpop.f32.mrf.mxu0
    %v391 = vadd.f32 %v317, %v390
    %392 = vmatmul.f32.gmra.mxu0 %v336
    %v393 = vpop.f32.mrf.mxu0
    %v394 = vadd.f32 %v321, %v393
    %395 = vmatmul.f32.gmra.mxu0 %v339
    %v396 = vpop.f32.mrf.mxu0
    %v397 = vadd.f32 %v325, %v396
    %398 = vmatmul.f32.gmra.mxu0 %v342
    %v399 = vpop.f32.mrf.mxu0
    %v400 = vadd.f32 %v329, %v399
    %401 = vdwg.mxu0
    %402 = vmatpush.msra.mxu0 0.0
    %403 = vmatpush.msra.mxu0 0.0
    %404 = vmatpush.msra.mxu0 0.0
    %405 = vmatpush.msra.mxu0 0.0
    %406 = vmatpush.msra.mxu0 0.0
    %407 = vmatpush.msra.mxu0 0.0
    %408 = vmatpush.msra.mxu0 0.0
    %409 = vmatpush.msra.mxu0 0.0
    %410 = vmatpush.msra.mxu0 0.0
    %411 = vmatpush.msra.mxu0 0.0
    %412 = vmatpush.msra.mxu0 0.0
    %413 = vmatpush.msra.mxu0 0.0
    %414 = vmatpush.msra.mxu0 %v301
    %415 = vmatpush.msra.mxu0 %v285
    %416 = vmatpush.msra.mxu0 %v269
    %417 = vmatpush.msra.mxu0 %v253
    %418 = vmatmul.f32.gmra.mxu0 %v333
    %v419 = vpop.f32.mrf.mxu0
    %v420 = vadd.f32 %v317, %v419
    %421 = vmatmul.f32.gmra.mxu0 %v336
    %v422 = vpop.f32.mrf.mxu0
    %v423 = vadd.f32 %v321, %v422
    %424 = vmatmul.f32.gmra.mxu0 %v339
    %v425 = vpop.f32.mrf.mxu0
    %v426 = vadd.f32 %v325, %v425
    %427 = vmatmul.f32.gmra.mxu0 %v342
    %v428 = vpop.f32.mrf.mxu0
    %v429 = vadd.f32 %v329, %v428
    %430 = vdwg.mxu0
    %431 = vmatpush.msra.mxu0 0.0
    %432 = vmatpush.msra.mxu0 0.0
    %433 = vmatpush.msra.mxu0 0.0
    %434 = vmatpush.msra.mxu0 0.0
    %435 = vmatpush.msra.mxu0 0.0
    %436 = vmatpush.msra.mxu0 0.0
    %437 = vmatpush.msra.mxu0 0.0
    %438 = vmatpush.msra.mxu0 0.0
    %439 = vmatpush.msra.mxu0 0.0
    %440 = vmatpush.msra.mxu0 0.0
    %441 = vmatpush.msra.mxu0 0.0
    %442 = vmatpush.msra.mxu0 0.0
    %443 = vmatpush.msra.mxu0 %v302
    %444 = vmatpush.msra.mxu0 %v286
    %445 = vmatpush.msra.mxu0 %v270
    %446 = vmatpush.msra.mxu0 %v254
    %447 = vmatmul.f32.gmra.mxu0 %v333
    %v448 = vpop.f32.mrf.mxu0
    %v449 = vadd.f32 %v317, %v448
    %450 = vmatmul.f32.gmra.mxu0 %v336
    %v451 = vpop.f32.mrf.mxu0
    %v452 = vadd.f32 %v321, %v451
    %453 = vmatmul.f32.gmra.mxu0 %v339
    %v454 = vpop.f32.mrf.mxu0
    %v455 = vadd.f32 %v325, %v454
    %456 = vmatmul.f32.gmra.mxu0 %v342
    %v457 = vpop.f32.mrf.mxu0
    %v458 = vadd.f32 %v329, %v457
    %459 = vdwg.mxu0
    %460 = vmatpush.msra.mxu0 0.0
    %461 = vmatpush.msra.mxu0 0.0
    %462 = vmatpush.msra.mxu0 0.0
    %463 = vmatpush.msra.mxu0 0.0
    %464 = vmatpush.msra.mxu0 0.0
    %465 = vmatpush.msra.mxu0 0.0
    %466 = vmatpush.msra.mxu0 0.0
    %467 = vmatpush.msra.mxu0 0.0
    %468 = vmatpush.msra.mxu0 0.0
    %469 = vmatpush.msra.mxu0 0.0
    %470 = vmatpush.msra.mxu0 0.0
    %471 = vmatpush.msra.mxu0 0.0
    %472 = vmatpush.msra.mxu0 %v303
    %473 = vmatpush.msra.mxu0 %v287
    %474 = vmatpush.msra.mxu0 %v271
    %475 = vmatpush.msra.mxu0 %v255
    %476 = vmatmul.f32.gmra.mxu0 %v333
    %v477 = vpop.f32.mrf.mxu0
    %v478 = vadd.f32 %v317, %v477
    %479 = vmatmul.f32.gmra.mxu0 %v336
    %v480 = vpop.f32.mrf.mxu0
    %v481 = vadd.f32 %v321, %v480
    %482 = vmatmul.f32.gmra.mxu0 %v339
    %v483 = vpop.f32.mrf.mxu0
    %v484 = vadd.f32 %v325, %v483
    %485 = vmatmul.f32.gmra.mxu0 %v342
    %v486 = vpop.f32.mrf.mxu0
    %v487 = vadd.f32 %v329, %v486
    %488 = vdwg.mxu0
    %489 = vmatpush.msra.mxu0 0.0
    %490 = vmatpush.msra.mxu0 0.0
    %491 = vmatpush.msra.mxu0 0.0
    %492 = vmatpush.msra.mxu0 0.0
    %493 = vmatpush.msra.mxu0 0.0
    %494 = vmatpush.msra.mxu0 0.0
    %495 = vmatpush.msra.mxu0 0.0
    %496 = vmatpush.msra.mxu0 0.0
    %497 = vmatpush.msra.mxu0 0.0
    %498 = vmatpush.msra.mxu0 0.0
    %499 = vmatpush.msra.mxu0 0.0
    %500 = vmatpush.msra.mxu0 0.0
    %501 = vmatpush.msra.mxu0 %v304
    %502 = vmatpush.msra.mxu0 %v288
    %503 = vmatpush.msra.mxu0 %v272
    %504 = vmatpush.msra.mxu0 %v256
    %505 = vmatmul.f32.gmra.mxu0 %v333
    %v506 = vpop.f32.mrf.mxu0
    %v507 = vadd.f32 %v317, %v506
    %508 = vmatmul.f32.gmra.mxu0 %v336
    %v509 = vpop.f32.mrf.mxu0
    %v510 = vadd.f32 %v321, %v509
    %511 = vmatmul.f32.gmra.mxu0 %v339
    %v512 = vpop.f32.mrf.mxu0
    %v513 = vadd.f32 %v325, %v512
    %514 = vmatmul.f32.gmra.mxu0 %v342
    %v515 = vpop.f32.mrf.mxu0
    %v516 = vadd.f32 %v329, %v515
    %517 = vdwg.mxu0
    %518 = vmatpush.msra.mxu0 0.0
    %519 = vmatpush.msra.mxu0 0.0
    %520 = vmatpush.msra.mxu0 0.0
    %521 = vmatpush.msra.mxu0 0.0
    %522 = vmatpush.msra.mxu0 0.0
    %523 = vmatpush.msra.mxu0 0.0
    %524 = vmatpush.msra.mxu0 0.0
    %525 = vmatpush.msra.mxu0 0.0
    %526 = vmatpush.msra.mxu0 0.0
    %527 = vmatpush.msra.mxu0 0.0
    %528 = vmatpush.msra.mxu0 0.0
    %529 = vmatpush.msra.mxu0 0.0
    %530 = vmatpush.msra.mxu0 %v305
    %531 = vmatpush.msra.mxu0 %v289
    %532 = vmatpush.msra.mxu0 %v273
    %533 = vmatpush.msra.mxu0 %v257
    %534 = vmatmul.f32.gmra.mxu0 %v333
    %v535 = vpop.f32.mrf.mxu0
    %v536 = vadd.f32 %v317, %v535
    %537 = vmatmul.f32.gmra.mxu0 %v336
    %v538 = vpop.f32.mrf.mxu0
    %v539 = vadd.f32 %v321, %v538
    %540 = vmatmul.f32.gmra.mxu0 %v339
    %v541 = vpop.f32.mrf.mxu0
    %v542 = vadd.f32 %v325, %v541
    %543 = vmatmul.f32.gmra.mxu0 %v342
    %v544 = vpop.f32.mrf.mxu0
    %v545 = vadd.f32 %v329, %v544
    %546 = vdwg.mxu0
    %547 = vmatpush.msra.mxu0 0.0
    %548 = vmatpush.msra.mxu0 0.0
    %549 = vmatpush.msra.mxu0 0.0
    %550 = vmatpush.msra.mxu0 0.0
    %551 = vmatpush.msra.mxu0 0.0
    %552 = vmatpush.msra.mxu0 0.0
    %553 = vmatpush.msra.mxu0 0.0
    %554 = vmatpush.msra.mxu0 0.0
    %555 = vmatpush.msra.mxu0 0.0
    %556 = vmatpush.msra.mxu0 0.0
    %557 = vmatpush.msra.mxu0 0.0
    %558 = vmatpush.msra.mxu0 0.0
    %559 = vmatpush.msra.mxu0 %v306
    %560 = vmatpush.msra.mxu0 %v290
    %561 = vmatpush.msra.mxu0 %v274
    %562 = vmatpush.msra.mxu0 %v258
    %563 = vmatmul.f32.gmra.mxu0 %v333
    %v564 = vpop.f32.mrf.mxu0
    %v565 = vadd.f32 %v317, %v564
    %566 = vmatmul.f32.gmra.mxu0 %v336
    %v567 = vpop.f32.mrf.mxu0
    %v568 = vadd.f32 %v321, %v567
    %569 = vmatmul.f32.gmra.mxu0 %v339
    %v570 = vpop.f32.mrf.mxu0
    %v571 = vadd.f32 %v325, %v570
    %572 = vmatmul.f32.gmra.mxu0 %v342
    %v573 = vpop.f32.mrf.mxu0
    %v574 = vadd.f32 %v329, %v573
    %575 = vdwg.mxu0
    %576 = vmatpush.msra.mxu0 0.0
    %577 = vmatpush.msra.mxu0 0.0
    %578 = vmatpush.msra.mxu0 0.0
    %579 = vmatpush.msra.mxu0 0.0
    %580 = vmatpush.msra.mxu0 0.0
    %581 = vmatpush.msra.mxu0 0.0
    %582 = vmatpush.msra.mxu0 0.0
    %583 = vmatpush.msra.mxu0 0.0
    %584 = vmatpush.msra.mxu0 0.0
    %585 = vmatpush.msra.mxu0 0.0
    %586 = vmatpush.msra.mxu0 0.0
    %587 = vmatpush.msra.mxu0 0.0
    %588 = vmatpush.msra.mxu0 %v307
    %589 = vmatpush.msra.mxu0 %v291
    %590 = vmatpush.msra.mxu0 %v275
    %591 = vmatpush.msra.mxu0 %v259
    %592 = vmatmul.f32.gmra.mxu0 %v333
    %v593 = vpop.f32.mrf.mxu0
    %v594 = vadd.f32 %v317, %v593
    %595 = vmatmul.f32.gmra.mxu0 %v336
    %v596 = vpop.f32.mrf.mxu0
    %v597 = vadd.f32 %v321, %v596
    %598 = vmatmul.f32.gmra.mxu0 %v339
    %v599 = vpop.f32.mrf.mxu0
    %v600 = vadd.f32 %v325, %v599
    %601 = vmatmul.f32.gmra.mxu0 %v342
    %v602 = vpop.f32.mrf.mxu0
    %v603 = vadd.f32 %v329, %v602
    %604 = vdwg.mxu0
    %605 = vmatpush.msra.mxu0 0.0
    %606 = vmatpush.msra.mxu0 0.0
    %607 = vmatpush.msra.mxu0 0.0
    %608 = vmatpush.msra.mxu0 0.0
    %609 = vmatpush.msra.mxu0 0.0
    %610 = vmatpush.msra.mxu0 0.0
    %611 = vmatpush.msra.mxu0 0.0
    %612 = vmatpush.msra.mxu0 0.0
    %613 = vmatpush.msra.mxu0 0.0
    %614 = vmatpush.msra.mxu0 0.0
    %615 = vmatpush.msra.mxu0 0.0
    %616 = vmatpush.msra.mxu0 0.0
    %617 = vmatpush.msra.mxu0 %v308
    %618 = vmatpush.msra.mxu0 %v292
    %619 = vmatpush.msra.mxu0 %v276
    %620 = vmatpush.msra.mxu0 %v260
    %621 = vmatmul.f32.gmra.mxu0 %v333
    %v622 = vpop.f32.mrf.mxu0
    %v623 = vadd.f32 %v317, %v622
    %624 = vmatmul.f32.gmra.mxu0 %v336
    %v625 = vpop.f32.mrf.mxu0
    %v626 = vadd.f32 %v321, %v625
    %627 = vmatmul.f32.gmra.mxu0 %v339
    %v628 = vpop.f32.mrf.mxu0
    %v629 = vadd.f32 %v325, %v628
    %630 = vmatmul.f32.gmra.mxu0 %v342
    %v631 = vpop.f32.mrf.mxu0
    %v632 = vadd.f32 %v329, %v631
    %633 = vdwg.mxu0
    %634 = vmatpush.msra.mxu0 0.0
    %635 = vmatpush.msra.mxu0 0.0
    %636 = vmatpush.msra.mxu0 0.0
    %637 = vmatpush.msra.mxu0 0.0
    %638 = vmatpush.msra.mxu0 0.0
    %639 = vmatpush.msra.mxu0 0.0
    %640 = vmatpush.msra.mxu0 0.0
    %641 = vmatpush.msra.mxu0 0.0
    %642 = vmatpush.msra.mxu0 0.0
    %643 = vmatpush.msra.mxu0 0.0
    %644 = vmatpush.msra.mxu0 0.0
    %645 = vmatpush.msra.mxu0 0.0
    %646 = vmatpush.msra.mxu0 %v309
    %647 = vmatpush.msra.mxu0 %v293
    %648 = vmatpush.msra.mxu0 %v277
    %649 = vmatpush.msra.mxu0 %v261
    %650 = vmatmul.f32.gmra.mxu0 %v333
    %v651 = vpop.f32.mrf.mxu0
    %v652 = vadd.f32 %v317, %v651
    %653 = vmatmul.f32.gmra.mxu0 %v336
    %v654 = vpop.f32.mrf.mxu0
    %v655 = vadd.f32 %v321, %v654
    %656 = vmatmul.f32.gmra.mxu0 %v339
    %v657 = vpop.f32.mrf.mxu0
    %v658 = vadd.f32 %v325, %v657
    %659 = vmatmul.f32.gmra.mxu0 %v342
    %v660 = vpop.f32.mrf.mxu0
    %v661 = vadd.f32 %v329, %v660
    %662 = vdwg.mxu0
    %663 = vmatpush.msra.mxu0 0.0
    %664 = vmatpush.msra.mxu0 0.0
    %665 = vmatpush.msra.mxu0 0.0
    %666 = vmatpush.msra.mxu0 0.0
    %667 = vmatpush.msra.mxu0 0.0
    %668 = vmatpush.msra.mxu0 0.0
    %669 = vmatpush.msra.mxu0 0.0
    %670 = vmatpush.msra.mxu0 0.0
    %671 = vmatpush.msra.mxu0 0.0
    %672 = vmatpush.msra.mxu0 0.0
    %673 = vmatpush.msra.mxu0 0.0
    %674 = vmatpush.msra.mxu0 0.0
    %675 = vmatpush.msra.mxu0 %v310
    %676 = vmatpush.msra.mxu0 %v294
    %677 = vmatpush.msra.mxu0 %v278
    %678 = vmatpush.msra.mxu0 %v262
    %679 = vmatmul.f32.gmra.mxu0 %v333
    %v680 = vpop.f32.mrf.mxu0
    %v681 = vadd.f32 %v317, %v680
    %682 = vmatmul.f32.gmra.mxu0 %v336
    %v683 = vpop.f32.mrf.mxu0
    %v684 = vadd.f32 %v321, %v683
    %685 = vmatmul.f32.gmra.mxu0 %v339
    %v686 = vpop.f32.mrf.mxu0
    %v687 = vadd.f32 %v325, %v686
    %688 = vmatmul.f32.gmra.mxu0 %v342
    %v689 = vpop.f32.mrf.mxu0
    %v690 = vadd.f32 %v329, %v689
    %691 = vdwg.mxu0
    %692 = vmatpush.msra.mxu0 0.0
    %693 = vmatpush.msra.mxu0 0.0
    %694 = vmatpush.msra.mxu0 0.0
    %695 = vmatpush.msra.mxu0 0.0
    %696 = vmatpush.msra.mxu0 0.0
    %697 = vmatpush.msra.mxu0 0.0
    %698 = vmatpush.msra.mxu0 0.0
    %699 = vmatpush.msra.mxu0 0.0
    %700 = vmatpush.msra.mxu0 0.0
    %701 = vmatpush.msra.mxu0 0.0
    %702 = vmatpush.msra.mxu0 0.0
    %703 = vmatpush.msra.mxu0 0.0
    %704 = vmatpush.msra.mxu0 %v311
    %705 = vmatpush.msra.mxu0 %v295
    %706 = vmatpush.msra.mxu0 %v279
    %707 = vmatpush.msra.mxu0 %v263
    %708 = vmatmul.f32.gmra.mxu0 %v333
    %v709 = vpop.f32.mrf.mxu0
    %v710 = vadd.f32 %v317, %v709
    %711 = vmatmul.f32.gmra.mxu0 %v336
    %v712 = vpop.f32.mrf.mxu0
    %v713 = vadd.f32 %v321, %v712
    %714 = vmatmul.f32.gmra.mxu0 %v339
    %v715 = vpop.f32.mrf.mxu0
    %v716 = vadd.f32 %v325, %v715
    %717 = vmatmul.f32.gmra.mxu0 %v342
    %v718 = vpop.f32.mrf.mxu0
    %v719 = vadd.f32 %v329, %v718
    %720 = vdwg.mxu0
    %721 = vmatpush.msra.mxu0 0.0
    %722 = vmatpush.msra.mxu0 0.0
    %723 = vmatpush.msra.mxu0 0.0
    %724 = vmatpush.msra.mxu0 0.0
    %725 = vmatpush.msra.mxu0 0.0
    %726 = vmatpush.msra.mxu0 0.0
    %727 = vmatpush.msra.mxu0 0.0
    %728 = vmatpush.msra.mxu0 0.0
    %729 = vmatpush.msra.mxu0 0.0
    %730 = vmatpush.msra.mxu0 0.0
    %731 = vmatpush.msra.mxu0 0.0
    %732 = vmatpush.msra.mxu0 0.0
    %733 = vmatpush.msra.mxu0 %v312
    %734 = vmatpush.msra.mxu0 %v296
    %735 = vmatpush.msra.mxu0 %v280
    %736 = vmatpush.msra.mxu0 %v264
    %737 = vmatmul.f32.gmra.mxu0 %v333
    %v738 = vpop.f32.mrf.mxu0
    %v739 = vadd.f32 %v317, %v738
    %740 = vmatmul.f32.gmra.mxu0 %v336
    %v741 = vpop.f32.mrf.mxu0
    %v742 = vadd.f32 %v321, %v741
    %743 = vmatmul.f32.gmra.mxu0 %v339
    %v744 = vpop.f32.mrf.mxu0
    %v745 = vadd.f32 %v325, %v744
    %746 = vmatmul.f32.gmra.mxu0 %v342
    %v747 = vpop.f32.mrf.mxu0
    %v748 = vadd.f32 %v329, %v747
    %749 = vdwg.mxu0
    %750 = vmatpush.msra.mxu0 0.0
    %751 = vmatpush.msra.mxu0 0.0
    %752 = vmatpush.msra.mxu0 0.0
    %753 = vmatpush.msra.mxu0 0.0
    %754 = vmatpush.msra.mxu0 0.0
    %755 = vmatpush.msra.mxu0 0.0
    %756 = vmatpush.msra.mxu0 0.0
    %757 = vmatpush.msra.mxu0 0.0
    %758 = vmatpush.msra.mxu0 0.0
    %759 = vmatpush.msra.mxu0 0.0
    %760 = vmatpush.msra.mxu0 0.0
    %761 = vmatpush.msra.mxu0 0.0
    %762 = vmatpush.msra.mxu0 %v313
    %763 = vmatpush.msra.mxu0 %v297
    %764 = vmatpush.msra.mxu0 %v281
    %765 = vmatpush.msra.mxu0 %v265
    %766 = vmatmul.f32.gmra.mxu0 %v333
    %v767 = vpop.f32.mrf.mxu0
    %v768 = vadd.f32 %v317, %v767
    %769 = vmatmul.f32.gmra.mxu0 %v336
    %v770 = vpop.f32.mrf.mxu0
    %v771 = vadd.f32 %v321, %v770
    %772 = vmatmul.f32.gmra.mxu0 %v339
    %v773 = vpop.f32.mrf.mxu0
    %v774 = vadd.f32 %v325, %v773
    %775 = vmatmul.f32.gmra.mxu0 %v342
    %v776 = vpop.f32.mrf.mxu0
    %v777 = vadd.f32 %v329, %v776
    %778 = vdwg.mxu0
    %779 = vmatpush.msra.mxu0 0.0
    %780 = vmatpush.msra.mxu0 0.0
    %781 = vmatpush.msra.mxu0 0.0
    %782 = vmatpush.msra.mxu0 0.0
    %783 = vmatpush.msra.mxu0 0.0
    %784 = vmatpush.msra.mxu0 0.0
    %785 = vmatpush.msra.mxu0 0.0
    %786 = vmatpush.msra.mxu0 0.0
    %787 = vmatpush.msra.mxu0 0.0
    %788 = vmatpush.msra.mxu0 0.0
    %789 = vmatpush.msra.mxu0 0.0
    %790 = vmatpush.msra.mxu0 0.0
    %791 = vmatpush.msra.mxu0 %v314
    %792 = vmatpush.msra.mxu0 %v298
    %793 = vmatpush.msra.mxu0 %v282
    %794 = vmatpush.msra.mxu0 %v266
    %795 = vmatmul.f32.gmra.mxu0 %v333
    %v796 = vpop.f32.mrf.mxu0
    %v797 = vadd.f32 %v317, %v796
    %798 = vmatmul.f32.gmra.mxu0 %v336
    %v799 = vpop.f32.mrf.mxu0
    %v800 = vadd.f32 %v321, %v799
    %801 = vmatmul.f32.gmra.mxu0 %v339
    %v802 = vpop.f32.mrf.mxu0
    %v803 = vadd.f32 %v325, %v802
    %804 = vmatmul.f32.gmra.mxu0 %v342
    %v805 = vpop.f32.mrf.mxu0
    %v806 = vadd.f32 %v329, %v805
    %807 = vdwg.mxu0
    %v808 = vmax.f32 %v362, 0.0
    %v809 = vmax.f32 %v391, 0.0
    %v810 = vmax.f32 %v420, 0.0
    %v811 = vmax.f32 %v449, 0.0
    %v812 = vmax.f32 %v478, 0.0
    %v813 = vmax.f32 %v507, 0.0
    %v814 = vmax.f32 %v536, 0.0
    %v815 = vmax.f32 %v565, 0.0
    %v816 = vmax.f32 %v594, 0.0
    %v817 = vmax.f32 %v623, 0.0
    %v818 = vmax.f32 %v652, 0.0
    %v819 = vmax.f32 %v681, 0.0
    %v820 = vmax.f32 %v710, 0.0
    %v821 = vmax.f32 %v739, 0.0
    %v822 = vmax.f32 %v768, 0.0
    %v823 = vmax.f32 %v797, 0.0
    %v824 = vmax.f32 %v365, 0.0
    %v825 = vmax.f32 %v394, 0.0
    %v826 = vmax.f32 %v423, 0.0
    %v827 = vmax.f32 %v452, 0.0
    %v828 = vmax.f32 %v481, 0.0
    %v829 = vmax.f32 %v510, 0.0
    %v830 = vmax.f32 %v539, 0.0
    %v831 = vmax.f32 %v568, 0.0
    %v832 = vmax.f32 %v597, 0.0
    %v833 = vmax.f32 %v626, 0.0
    %v834 = vmax.f32 %v655, 0.0
    %v835 = vmax.f32 %v684, 0.0
    %v836 = vmax.f32 %v713, 0.0
    %v837 = vmax.f32 %v742, 0.0
    %v838 = vmax.f32 %v771, 0.0
    %v839 = vmax.f32 %v800, 0.0
    %v840 = vmax.f32 %v368, 0.0
    %v841 = vmax.f32 %v397, 0.0
    %v842 = vmax.f32 %v426, 0.0
    %v843 = vmax.f32 %v455, 0.0
    %v844 = vmax.f32 %v484, 0.0
    %v845 = vmax.f32 %v513, 0.0
    %v846 = vmax.f32 %v542, 0.0
    %v847 = vmax.f32 %v571, 0.0
    %v848 = vmax.f32 %v600, 0.0
    %v849 = vmax.f32 %v629, 0.0
    %v850 = vmax.f32 %v658, 0.0
    %v851 = vmax.f32 %v687, 0.0
    %v852 = vmax.f32 %v716, 0.0
    %v853 = vmax.f32 %v745, 0.0
    %v854 = vmax.f32 %v774, 0.0
    %v855 = vmax.f32 %v803, 0.0
    %v856 = vmax.f32 %v371, 0.0
    %v857 = vmax.f32 %v400, 0.0
    %v858 = vmax.f32 %v429, 0.0
    %v859 = vmax.f32 %v458, 0.0
    %v860 = vmax.f32 %v487, 0.0
    %v861 = vmax.f32 %v516, 0.0
    %v862 = vmax.f32 %v545, 0.0
    %v863 = vmax.f32 %v574, 0.0
    %v864 = vmax.f32 %v603, 0.0
    %v865 = vmax.f32 %v632, 0.0
    %v866 = vmax.f32 %v661, 0.0
    %v867 = vmax.f32 %v690, 0.0
    %v868 = vmax.f32 %v719, 0.0
    %v869 = vmax.f32 %v748, 0.0
    %v870 = vmax.f32 %v777, 0.0
    %v871 = vmax.f32 %v806, 0.0
    %873 = vset.pattern.permute.xlu0 32
    %874 = vperm.xlu0 %873, %v52
    %v875 = vpop.permute.xlu0 %874
    %v877 = vsel %vm331, %v52, 0
    %879 = vmatpush.msra.mxu0 0.0
    %880 = vmatpush.msra.mxu0 0.0
    %881 = vmatpush.msra.mxu0 0.0
    %882 = vmatpush.msra.mxu0 0.0
    %883 = vmatpush.msra.mxu0 0.0
    %884 = vmatpush.msra.mxu0 0.0
    %885 = vmatpush.msra.mxu0 0.0
    %886 = vmatpush.msra.mxu0 0.0
    %887 = vmatpush.msra.mxu0 0.0
    %888 = vmatpush.msra.mxu0 0.0
    %889 = vmatpush.msra.mxu0 0.0
    %890 = vmatpush.msra.mxu0 0.0
    %891 = vmatpush.msra.mxu0 %v856
    %892 = vmatpush.msra.mxu0 %v840
    %893 = vmatpush.msra.mxu0 %v824
    %894 = vmatpush.msra.mxu0 %v808
    %895 = vmatmul.f32.gmra.mxu0 %v877
    %v896 = vpop.f32.mrf.mxu0
    %v897 = vadd.f32 %v875, %v896
    %898 = vdwg.mxu0
    %899 = vmatpush.msra.mxu0 0.0
    %900 = vmatpush.msra.mxu0 0.0
    %901 = vmatpush.msra.mxu0 0.0
    %902 = vmatpush.msra.mxu0 0.0
    %903 = vmatpush.msra.mxu0 0.0
    %904 = vmatpush.msra.mxu0 0.0
    %905 = vmatpush.msra.mxu0 0.0
    %906 = vmatpush.msra.mxu0 0.0
    %907 = vmatpush.msra.mxu0 0.0
    %908 = vmatpush.msra.mxu0 0.0
    %909 = vmatpush.msra.mxu0 0.0
    %910 = vmatpush.msra.mxu0 0.0
    %911 = vmatpush.msra.mxu0 %v857
    %912 = vmatpush.msra.mxu0 %v841
    %913 = vmatpush.msra.mxu0 %v825
    %914 = vmatpush.msra.mxu0 %v809
    %915 = vmatmul.f32.gmra.mxu0 %v877
    %v916 = vpop.f32.mrf.mxu0
    %v917 = vadd.f32 %v875, %v916
    %918 = vdwg.mxu0
    %919 = vmatpush.msra.mxu0 0.0
    %920 = vmatpush.msra.mxu0 0.0
    %921 = vmatpush.msra.mxu0 0.0
    %922 = vmatpush.msra.mxu0 0.0
    %923 = vmatpush.msra.mxu0 0.0
    %924 = vmatpush.msra.mxu0 0.0
    %925 = vmatpush.msra.mxu0 0.0
    %926 = vmatpush.msra.mxu0 0.0
    %927 = vmatpush.msra.mxu0 0.0
    %928 = vmatpush.msra.mxu0 0.0
    %929 = vmatpush.msra.mxu0 0.0
    %930 = vmatpush.msra.mxu0 0.0
    %931 = vmatpush.msra.mxu0 %v858
    %932 = vmatpush.msra.mxu0 %v842
    %933 = vmatpush.msra.mxu0 %v826
    %934 = vmatpush.msra.mxu0 %v810
    %935 = vmatmul.f32.gmra.mxu0 %v877
    %v936 = vpop.f32.mrf.mxu0
    %v937 = vadd.f32 %v875, %v936
    %938 = vdwg.mxu0
    %939 = vmatpush.msra.mxu0 0.0
    %940 = vmatpush.msra.mxu0 0.0
    %941 = vmatpush.msra.mxu0 0.0
    %942 = vmatpush.msra.mxu0 0.0
    %943 = vmatpush.msra.mxu0 0.0
    %944 = vmatpush.msra.mxu0 0.0
    %945 = vmatpush.msra.mxu0 0.0
    %946 = vmatpush.msra.mxu0 0.0
    %947 = vmatpush.msra.mxu0 0.0
    %948 = vmatpush.msra.mxu0 0.0
    %949 = vmatpush.msra.mxu0 0.0
    %950 = vmatpush.msra.mxu0 0.0
    %951 = vmatpush.msra.mxu0 %v859
    %952 = vmatpush.msra.mxu0 %v843
    %953 = vmatpush.msra.mxu0 %v827
    %954 = vmatpush.msra.mxu0 %v811
    %955 = vmatmul.f32.gmra.mxu0 %v877
    %v956 = vpop.f32.mrf.mxu0
    %v957 = vadd.f32 %v875, %v956
    %958 = vdwg.mxu0
    %959 = vmatpush.msra.mxu0 0.0
    %960 = vmatpush.msra.mxu0 0.0
    %961 = vmatpush.msra.mxu0 0.0
    %962 = vmatpush.msra.mxu0 0.0
    %963 = vmatpush.msra.mxu0 0.0
    %964 = vmatpush.msra.mxu0 0.0
    %965 = vmatpush.msra.mxu0 0.0
    %966 = vmatpush.msra.mxu0 0.0
    %967 = vmatpush.msra.mxu0 0.0
    %968 = vmatpush.msra.mxu0 0.0
    %969 = vmatpush.msra.mxu0 0.0
    %970 = vmatpush.msra.mxu0 0.0
    %971 = vmatpush.msra.mxu0 %v860
    %972 = vmatpush.msra.mxu0 %v844
    %973 = vmatpush.msra.mxu0 %v828
    %974 = vmatpush.msra.mxu0 %v812
    %975 = vmatmul.f32.gmra.mxu0 %v877
    %v976 = vpop.f32.mrf.mxu0
    %v977 = vadd.f32 %v875, %v976
    %978 = vdwg.mxu0
    %979 = vmatpush.msra.mxu0 0.0
    %980 = vmatpush.msra.mxu0 0.0
    %981 = vmatpush.msra.mxu0 0.0
    %982 = vmatpush.msra.mxu0 0.0
    %983 = vmatpush.msra.mxu0 0.0
    %984 = vmatpush.msra.mxu0 0.0
    %985 = vmatpush.msra.mxu0 0.0
    %986 = vmatpush.msra.mxu0 0.0
    %987 = vmatpush.msra.mxu0 0.0
    %988 = vmatpush.msra.mxu0 0.0
    %989 = vmatpush.msra.mxu0 0.0
    %990 = vmatpush.msra.mxu0 0.0
    %991 = vmatpush.msra.mxu0 %v861
    %992 = vmatpush.msra.mxu0 %v845
    %993 = vmatpush.msra.mxu0 %v829
    %994 = vmatpush.msra.mxu0 %v813
    %995 = vmatmul.f32.gmra.mxu0 %v877
    %v996 = vpop.f32.mrf.mxu0
    %v997 = vadd.f32 %v875, %v996
    %998 = vdwg.mxu0
    %999 = vmatpush.msra.mxu0 0.0
    %1000 = vmatpush.msra.mxu0 0.0
    %1001 = vmatpush.msra.mxu0 0.0
    %1002 = vmatpush.msra.mxu0 0.0
    %1003 = vmatpush.msra.mxu0 0.0
    %1004 = vmatpush.msra.mxu0 0.0
    %1005 = vmatpush.msra.mxu0 0.0
    %1006 = vmatpush.msra.mxu0 0.0
    %1007 = vmatpush.msra.mxu0 0.0
    %1008 = vmatpush.msra.mxu0 0.0
    %1009 = vmatpush.msra.mxu0 0.0
    %1010 = vmatpush.msra.mxu0 0.0
    %1011 = vmatpush.msra.mxu0 %v862
    %1012 = vmatpush.msra.mxu0 %v846
    %1013 = vmatpush.msra.mxu0 %v830
    %1014 = vmatpush.msra.mxu0 %v814
    %1015 = vmatmul.f32.gmra.mxu0 %v877
    %v1016 = vpop.f32.mrf.mxu0
    %v1017 = vadd.f32 %v875, %v1016
    %1018 = vdwg.mxu0
    %1019 = vmatpush.msra.mxu0 0.0
    %1020 = vmatpush.msra.mxu0 0.0
    %1021 = vmatpush.msra.mxu0 0.0
    %1022 = vmatpush.msra.mxu0 0.0
    %1023 = vmatpush.msra.mxu0 0.0
    %1024 = vmatpush.msra.mxu0 0.0
    %1025 = vmatpush.msra.mxu0 0.0
    %1026 = vmatpush.msra.mxu0 0.0
    %1027 = vmatpush.msra.mxu0 0.0
    %1028 = vmatpush.msra.mxu0 0.0
    %1029 = vmatpush.msra.mxu0 0.0
    %1030 = vmatpush.msra.mxu0 0.0
    %1031 = vmatpush.msra.mxu0 %v863
    %1032 = vmatpush.msra.mxu0 %v847
    %1033 = vmatpush.msra.mxu0 %v831
    %1034 = vmatpush.msra.mxu0 %v815
    %1035 = vmatmul.f32.gmra.mxu0 %v877
    %v1036 = vpop.f32.mrf.mxu0
    %v1037 = vadd.f32 %v875, %v1036
    %1038 = vdwg.mxu0
    %1039 = vmatpush.msra.mxu0 0.0
    %1040 = vmatpush.msra.mxu0 0.0
    %1041 = vmatpush.msra.mxu0 0.0
    %1042 = vmatpush.msra.mxu0 0.0
    %1043 = vmatpush.msra.mxu0 0.0
    %1044 = vmatpush.msra.mxu0 0.0
    %1045 = vmatpush.msra.mxu0 0.0
    %1046 = vmatpush.msra.mxu0 0.0
    %1047 = vmatpush.msra.mxu0 0.0
    %1048 = vmatpush.msra.mxu0 0.0
    %1049 = vmatpush.msra.mxu0 0.0
    %1050 = vmatpush.msra.mxu0 0.0
    %1051 = vmatpush.msra.mxu0 %v864
    %1052 = vmatpush.msra.mxu0 %v848
    %1053 = vmatpush.msra.mxu0 %v832
    %1054 = vmatpush.msra.mxu0 %v816
    %1055 = vmatmul.f32.gmra.mxu0 %v877
    %v1056 = vpop.f32.mrf.mxu0
    %v1057 = vadd.f32 %v875, %v1056
    %1058 = vdwg.mxu0
    %1059 = vmatpush.msra.mxu0 0.0
    %1060 = vmatpush.msra.mxu0 0.0
    %1061 = vmatpush.msra.mxu0 0.0
    %1062 = vmatpush.msra.mxu0 0.0
    %1063 = vmatpush.msra.mxu0 0.0
    %1064 = vmatpush.msra.mxu0 0.0
    %1065 = vmatpush.msra.mxu0 0.0
    %1066 = vmatpush.msra.mxu0 0.0
    %1067 = vmatpush.msra.mxu0 0.0
    %1068 = vmatpush.msra.mxu0 0.0
    %1069 = vmatpush.msra.mxu0 0.0
    %1070 = vmatpush.msra.mxu0 0.0
    %1071 = vmatpush.msra.mxu0 %v865
    %1072 = vmatpush.msra.mxu0 %v849
    %1073 = vmatpush.msra.mxu0 %v833
    %1074 = vmatpush.msra.mxu0 %v817
    %1075 = vmatmul.f32.gmra.mxu0 %v877
    %v1076 = vpop.f32.mrf.mxu0
    %v1077 = vadd.f32 %v875, %v1076
    %1078 = vdwg.mxu0
    %1079 = vmatpush.msra.mxu0 0.0
    %1080 = vmatpush.msra.mxu0 0.0
    %1081 = vmatpush.msra.mxu0 0.0
    %1082 = vmatpush.msra.mxu0 0.0
    %1083 = vmatpush.msra.mxu0 0.0
    %1084 = vmatpush.msra.mxu0 0.0
    %1085 = vmatpush.msra.mxu0 0.0
    %1086 = vmatpush.msra.mxu0 0.0
    %1087 = vmatpush.msra.mxu0 0.0
    %1088 = vmatpush.msra.mxu0 0.0
    %1089 = vmatpush.msra.mxu0 0.0
    %1090 = vmatpush.msra.mxu0 0.0
    %1091 = vmatpush.msra.mxu0 %v866
    %1092 = vmatpush.msra.mxu0 %v850
    %1093 = vmatpush.msra.mxu0 %v834
    %1094 = vmatpush.msra.mxu0 %v818
    %1095 = vmatmul.f32.gmra.mxu0 %v877
    %v1096 = vpop.f32.mrf.mxu0
    %v1097 = vadd.f32 %v875, %v1096
    %1098 = vdwg.mxu0
    %1099 = vmatpush.msra.mxu0 0.0
    %1100 = vmatpush.msra.mxu0 0.0
    %1101 = vmatpush.msra.mxu0 0.0
    %1102 = vmatpush.msra.mxu0 0.0
    %1103 = vmatpush.msra.mxu0 0.0
    %1104 = vmatpush.msra.mxu0 0.0
    %1105 = vmatpush.msra.mxu0 0.0
    %1106 = vmatpush.msra.mxu0 0.0
    %1107 = vmatpush.msra.mxu0 0.0
    %1108 = vmatpush.msra.mxu0 0.0
    %1109 = vmatpush.msra.mxu0 0.0
    %1110 = vmatpush.msra.mxu0 0.0
    %1111 = vmatpush.msra.mxu0 %v867
    %1112 = vmatpush.msra.mxu0 %v851
    %1113 = vmatpush.msra.mxu0 %v835
    %1114 = vmatpush.msra.mxu0 %v819
    %1115 = vmatmul.f32.gmra.mxu0 %v877
    %v1116 = vpop.f32.mrf.mxu0
    %v1117 = vadd.f32 %v875, %v1116
    %1118 = vdwg.mxu0
    %1119 = vmatpush.msra.mxu0 0.0
    %1120 = vmatpush.msra.mxu0 0.0
    %1121 = vmatpush.msra.mxu0 0.0
    %1122 = vmatpush.msra.mxu0 0.0
    %1123 = vmatpush.msra.mxu0 0.0
    %1124 = vmatpush.msra.mxu0 0.0
    %1125 = vmatpush.msra.mxu0 0.0
    %1126 = vmatpush.msra.mxu0 0.0
    %1127 = vmatpush.msra.mxu0 0.0
    %1128 = vmatpush.msra.mxu0 0.0
    %1129 = vmatpush.msra.mxu0 0.0
    %1130 = vmatpush.msra.mxu0 0.0
    %1131 = vmatpush.msra.mxu0 %v868
    %1132 = vmatpush.msra.mxu0 %v852
    %1133 = vmatpush.msra.mxu0 %v836
    %1134 = vmatpush.msra.mxu0 %v820
    %1135 = vmatmul.f32.gmra.mxu0 %v877
    %v1136 = vpop.f32.mrf.mxu0
    %v1137 = vadd.f32 %v875, %v1136
    %1138 = vdwg.mxu0
    %1139 = vmatpush.msra.mxu0 0.0
    %1140 = vmatpush.msra.mxu0 0.0
    %1141 = vmatpush.msra.mxu0 0.0
    %1142 = vmatpush.msra.mxu0 0.0
    %1143 = vmatpush.msra.mxu0 0.0
    %1144 = vmatpush.msra.mxu0 0.0
    %1145 = vmatpush.msra.mxu0 0.0
    %1146 = vmatpush.msra.mxu0 0.0
    %1147 = vmatpush.msra.mxu0 0.0
    %1148 = vmatpush.msra.mxu0 0.0
    %1149 = vmatpush.msra.mxu0 0.0
    %1150 = vmatpush.msra.mxu0 0.0
    %1151 = vmatpush.msra.mxu0 %v869
    %1152 = vmatpush.msra.mxu0 %v853
    %1153 = vmatpush.msra.mxu0 %v837
    %1154 = vmatpush.msra.mxu0 %v821
    %1155 = vmatmul.f32.gmra.mxu0 %v877
    %v1156 = vpop.f32.mrf.mxu0
    %v1157 = vadd.f32 %v875, %v1156
    %1158 = vdwg.mxu0
    %1159 = vmatpush.msra.mxu0 0.0
    %1160 = vmatpush.msra.mxu0 0.0
    %1161 = vmatpush.msra.mxu0 0.0
    %1162 = vmatpush.msra.mxu0 0.0
    %1163 = vmatpush.msra.mxu0 0.0
    %1164 = vmatpush.msra.mxu0 0.0
    %1165 = vmatpush.msra.mxu0 0.0
    %1166 = vmatpush.msra.mxu0 0.0
    %1167 = vmatpush.msra.mxu0 0.0
    %1168 = vmatpush.msra.mxu0 0.0
    %1169 = vmatpush.msra.mxu0 0.0
    %1170 = vmatpush.msra.mxu0 0.0
    %1171 = vmatpush.msra.mxu0 %v870
    %1172 = vmatpush.msra.mxu0 %v854
    %1173 = vmatpush.msra.mxu0 %v838
    %1174 = vmatpush.msra.mxu0 %v822
    %1175 = vmatmul.f32.gmra.mxu0 %v877
    %v1176 = vpop.f32.mrf.mxu0
    %v1177 = vadd.f32 %v875, %v1176
    %1178 = vdwg.mxu0
    %1179 = vmatpush.msra.mxu0 0.0
    %1180 = vmatpush.msra.mxu0 0.0
    %1181 = vmatpush.msra.mxu0 0.0
    %1182 = vmatpush.msra.mxu0 0.0
    %1183 = vmatpush.msra.mxu0 0.0
    %1184 = vmatpush.msra.mxu0 0.0
    %1185 = vmatpush.msra.mxu0 0.0
    %1186 = vmatpush.msra.mxu0 0.0
    %1187 = vmatpush.msra.mxu0 0.0
    %1188 = vmatpush.msra.mxu0 0.0
    %1189 = vmatpush.msra.mxu0 0.0
    %1190 = vmatpush.msra.mxu0 0.0
    %1191 = vmatpush.msra.mxu0 %v871
    %1192 = vmatpush.msra.mxu0 %v855
    %1193 = vmatpush.msra.mxu0 %v839
    %1194 = vmatpush.msra.mxu0 %v823
    %1195 = vmatmul.f32.gmra.mxu0 %v877
    %v1196 = vpop.f32.mrf.mxu0
    %v1197 = vadd.f32 %v875, %v1196
    %1198 = vdwg.mxu0
    %v1199 = vmax.f32 %v897, 0.0
    %v1200 = vmax.f32 %v917, 0.0
    %v1201 = vmax.f32 %v937, 0.0
    %v1202 = vmax.f32 %v957, 0.0
    %v1203 = vmax.f32 %v977, 0.0
    %v1204 = vmax.f32 %v997, 0.0
    %v1205 = vmax.f32 %v1017, 0.0
    %v1206 = vmax.f32 %v1037, 0.0
    %v1207 = vmax.f32 %v1057, 0.0
    %v1208 = vmax.f32 %v1077, 0.0
    %v1209 = vmax.f32 %v1097, 0.0
    %v1210 = vmax.f32 %v1117, 0.0
    %v1211 = vmax.f32 %v1137, 0.0
    %v1212 = vmax.f32 %v1157, 0.0
    %v1213 = vmax.f32 %v1177, 0.0
    %v1214 = vmax.f32 %v1197, 0.0
    %v1215 = vand.u32 2147483647, %v897
    %v1216 = vand.u32 2147483647, %v917
    %v1217 = vand.u32 2147483647, %v937
    %v1218 = vand.u32 2147483647, %v957
    %v1219 = vand.u32 2147483647, %v977
    %v1220 = vand.u32 2147483647, %v997
    %v1221 = vand.u32 2147483647, %v1017
    %v1222 = vand.u32 2147483647, %v1037
    %v1223 = vand.u32 2147483647, %v1057
    %v1224 = vand.u32 2147483647, %v1077
    %v1225 = vand.u32 2147483647, %v1097
    %v1226 = vand.u32 2147483647, %v1117
    %v1227 = vand.u32 2147483647, %v1137
    %v1228 = vand.u32 2147483647, %v1157
    %v1229 = vand.u32 2147483647, %v1177
    %v1230 = vand.u32 2147483647, %v1197
    %v1231 = vsub.f32 0.0, %v1215
    %v1232 = vsub.f32 0.0, %v1216
    %v1233 = vsub.f32 0.0, %v1217
    %v1234 = vsub.f32 0.0, %v1218
    %v1235 = vsub.f32 0.0, %v1219
    %v1236 = vsub.f32 0.0, %v1220
    %v1237 = vsub.f32 0.0, %v1221
    %v1238 = vsub.f32 0.0, %v1222
    %v1239 = vsub.f32 0.0, %v1223
    %v1240 = vsub.f32 0.0, %v1224
    %v1241 = vsub.f32 0.0, %v1225
    %v1242 = vsub.f32 0.0, %v1226
    %v1243 = vsub.f32 0.0, %v1227
    %v1244 = vsub.f32 0.0, %v1228
    %v1245 = vsub.f32 0.0, %v1229
    %v1246 = vsub.f32 0.0, %v1230
    %v1247 = vmul.f32 %v1231, 1.442695
    %v1248 = vpow.pop %v1247
    %v1249 = vmul.f32 %v1232, 1.442695
    %v1250 = vpow.pop %v1249
    %v1251 = vmul.f32 %v1233, 1.442695
    %v1252 = vpow.pop %v1251
    %v1253 = vmul.f32 %v1234, 1.442695
    %v1254 = vpow.pop %v1253
    %v1255 = vmul.f32 %v1235, 1.442695
    %v1256 = vpow.pop %v1255
    %v1257 = vmul.f32 %v1236, 1.442695
    %v1258 = vpow.pop %v1257
    %v1259 = vmul.f32 %v1237, 1.442695
    %v1260 = vpow.pop %v1259
    %v1261 = vmul.f32 %v1238, 1.442695
    %v1262 = vpow.pop %v1261
    %v1263 = vmul.f32 %v1239, 1.442695
    %v1264 = vpow.pop %v1263
    %v1265 = vmul.f32 %v1240, 1.442695
    %v1266 = vpow.pop %v1265
    %v1267 = vmul.f32 %v1241, 1.442695
    %v1268 = vpow.pop %v1267
    %v1269 = vmul.f32 %v1242, 1.442695
    %v1270 = vpow.pop %v1269
    %v1271 = vmul.f32 %v1243, 1.442695
    %v1272 = vpow.pop %v1271
    %v1273 = vmul.f32 %v1244, 1.442695
    %v1274 = vpow.pop %v1273
    %v1275 = vmul.f32 %v1245, 1.442695
    %v1276 = vpow.pop %v1275
    %v1277 = vmul.f32 %v1246, 1.442695
    %v1278 = vpow.pop %v1277
    %v1279 = vadd.f32 %v1248, 1.0
    %v1280 = vadd.f32 %v1250, 1.0
    %v1281 = vadd.f32 %v1252, 1.0
    %v1282 = vadd.f32 %v1254, 1.0
    %v1283 = vadd.f32 %v1256, 1.0
    %v1284 = vadd.f32 %v1258, 1.0
    %v1285 = vadd.f32 %v1260, 1.0
    %v1286 = vadd.f32 %v1262, 1.0
    %v1287 = vadd.f32 %v1264, 1.0
    %v1288 = vadd.f32 %v1266, 1.0
    %v1289 = vadd.f32 %v1268, 1.0
    %v1290 = vadd.f32 %v1270, 1.0
    %v1291 = vadd.f32 %v1272, 1.0
    %v1292 = vadd.f32 %v1274, 1.0
    %v1293 = vadd.f32 %v1276, 1.0
    %v1294 = vadd.f32 %v1278, 1.0
    %v1295 = vlog2.pop %v1279
    %v1296 = vmul.f32 %v1295, 0.6931472
    %v1297 = vlog2.pop %v1280
    %v1298 = vmul.f32 %v1297, 0.6931472
    %v1299 = vlog2.pop %v1281
    %v1300 = vmul.f32 %v1299, 0.6931472
    %v1301 = vlog2.pop %v1282
    %v1302 = vmul.f32 %v1301, 0.6931472
    %v1303 = vlog2.pop %v1283
    %v1304 = vmul.f32 %v1303, 0.6931472
    %v1305 = vlog2.pop %v1284
    %v1306 = vmul.f32 %v1305, 0.6931472
    %v1307 = vlog2.pop %v1285
    %v1308 = vmul.f32 %v1307, 0.6931472
    %v1309 = vlog2.pop %v1286
    %v1310 = vmul.f32 %v1309, 0.6931472
    %v1311 = vlog2.pop %v1287
    %v1312 = vmul.f32 %v1311, 0.6931472
    %v1313 = vlog2.pop %v1288
    %v1314 = vmul.f32 %v1313, 0.6931472
    %v1315 = vlog2.pop %v1289
    %v1316 = vmul.f32 %v1315, 0.6931472
    %v1317 = vlog2.pop %v1290
    %v1318 = vmul.f32 %v1317, 0.6931472
    %v1319 = vlog2.pop %v1291
    %v1320 = vmul.f32 %v1319, 0.6931472
    %v1321 = vlog2.pop %v1292
    %v1322 = vmul.f32 %v1321, 0.6931472
    %v1323 = vlog2.pop %v1293
    %v1324 = vmul.f32 %v1323, 0.6931472
    %v1325 = vlog2.pop %v1294
    %v1326 = vmul.f32 %v1325, 0.6931472
    %v1327 = vadd.f32 %v1199, %v1296
    %v1328 = vadd.f32 %v1200, %v1298
    %v1329 = vadd.f32 %v1201, %v1300
    %v1330 = vadd.f32 %v1202, %v1302
    %v1331 = vadd.f32 %v1203, %v1304
    %v1332 = vadd.f32 %v1204, %v1306
    %v1333 = vadd.f32 %v1205, %v1308
    %v1334 = vadd.f32 %v1206, %v1310
    %v1335 = vadd.f32 %v1207, %v1312
    %v1336 = vadd.f32 %v1208, %v1314
    %v1337 = vadd.f32 %v1209, %v1316
    %v1338 = vadd.f32 %v1210, %v1318
    %v1339 = vadd.f32 %v1211, %v1320
    %v1340 = vadd.f32 %v1212, %v1322
    %v1341 = vadd.f32 %v1213, %v1324
    %v1342 = vadd.f32 %v1214, %v1326
    %v1343 = vld [vmem:[#allocation2] sm:$0xff]
    %v1344 = vld [vmem:[#allocation2 + $0x8] sm:$0xff]
    %v1345 = vld [vmem:[#allocation2 + $0x10] sm:$0xff]
    %v1346 = vld [vmem:[#allocation2 + $0x18] sm:$0xff]
    %v1347 = vld [vmem:[#allocation2 + $0x20] sm:$0xff]
    %v1348 = vld [vmem:[#allocation2 + $0x28] sm:$0xff]
    %v1349 = vld [vmem:[#allocation2 + $0x30] sm:$0xff]
    %v1350 = vld [vmem:[#allocation2 + $0x38] sm:$0xff]
    %v1351 = vld [vmem:[#allocation2 + $0x40] sm:$0xff]
    %v1352 = vld [vmem:[#allocation2 + $0x48] sm:$0xff]
    %v1353 = vld [vmem:[#allocation2 + $0x50] sm:$0xff]
    %v1354 = vld [vmem:[#allocation2 + $0x58] sm:$0xff]
    %v1355 = vld [vmem:[#allocation2 + $0x60] sm:$0xff]
    %v1356 = vld [vmem:[#allocation2 + $0x68] sm:$0xff]
    %v1357 = vld [vmem:[#allocation2 + $0x70] sm:$0xff]
    %v1358 = vld [vmem:[#allocation2 + $0x78] sm:$0xff]
    %v1359 = vld [vmem:[#allocation2 + $0x80] sm:$0xff]
    %v1360 = vld [vmem:[#allocation2 + $0x88] sm:$0xff]
    %v1361 = vld [vmem:[#allocation2 + $0x90] sm:$0xff]
    %v1362 = vld [vmem:[#allocation2 + $0x98] sm:$0xff]
    %v1363 = vld [vmem:[#allocation2 + $0xa0] sm:$0xff]
    %v1364 = vld [vmem:[#allocation2 + $0xa8] sm:$0xff]
    %v1365 = vld [vmem:[#allocation2 + $0xb0] sm:$0xff]
    %v1366 = vld [vmem:[#allocation2 + $0xb8] sm:$0xff]
    %v1367 = vld [vmem:[#allocation2 + $0xc0] sm:$0xff]
    %v1368 = vld [vmem:[#allocation2 + $0xc8] sm:$0xff]
    %v1369 = vld [vmem:[#allocation2 + $0xd0] sm:$0xff]
    %v1370 = vld [vmem:[#allocation2 + $0xd8] sm:$0xff]
    %v1371 = vld [vmem:[#allocation2 + $0xe0] sm:$0xff]
    %v1372 = vld [vmem:[#allocation2 + $0xe8] sm:$0xff]
    %v1373 = vld [vmem:[#allocation2 + $0xf0] sm:$0xff]
    %v1374 = vld [vmem:[#allocation2 + $0xf8] sm:$0xff]
    %1375 = vmatpush.xpose.msra.mxu0 0.0
    %1376 = vmatpush.xpose.msra.mxu0 0.0
    %1377 = vmatpush.xpose.msra.mxu0 0.0
    %1378 = vmatpush.xpose.msra.mxu0 0.0
    %1379 = vmatpush.xpose.msra.mxu0 0.0
    %1380 = vmatpush.xpose.msra.mxu0 0.0
    %1381 = vmatpush.xpose.msra.mxu0 0.0
    %1382 = vmatpush.xpose.msra.mxu0 0.0
    %1383 = vmatpush.xpose.msra.mxu0 0.0
    %1384 = vmatpush.xpose.msra.mxu0 0.0
    %1385 = vmatpush.xpose.msra.mxu0 0.0
    %1386 = vmatpush.xpose.msra.mxu0 0.0
    %1387 = vmatpush.xpose.msra.mxu0 0.0
    %1388 = vmatpush.xpose.msra.mxu0 0.0
    %1389 = vmatpush.xpose.msra.mxu0 0.0
    %1390 = vmatpush.xpose.msra.mxu0 %v1327
    %1391 = vmatmul.f32.gmra.mxu0 %v1343
    %v1392 = vpop.f32.mrf.mxu0
    %v1393 = vadd.f32 0.0, %v1392
    %1394 = vmatmul.f32.gmra.mxu0 %v1359
    %v1395 = vpop.f32.mrf.mxu0
    %v1396 = vadd.f32 0.0, %v1395
    %1397 = vdwg.mxu0
    %1398 = vmatpush.xpose.msra.mxu0 0.0
    %1399 = vmatpush.xpose.msra.mxu0 0.0
    %1400 = vmatpush.xpose.msra.mxu0 0.0
    %1401 = vmatpush.xpose.msra.mxu0 0.0
    %1402 = vmatpush.xpose.msra.mxu0 0.0
    %1403 = vmatpush.xpose.msra.mxu0 0.0
    %1404 = vmatpush.xpose.msra.mxu0 0.0
    %1405 = vmatpush.xpose.msra.mxu0 0.0
    %1406 = vmatpush.xpose.msra.mxu0 0.0
    %1407 = vmatpush.xpose.msra.mxu0 0.0
    %1408 = vmatpush.xpose.msra.mxu0 0.0
    %1409 = vmatpush.xpose.msra.mxu0 0.0
    %1410 = vmatpush.xpose.msra.mxu0 0.0
    %1411 = vmatpush.xpose.msra.mxu0 0.0
    %1412 = vmatpush.xpose.msra.mxu0 0.0
    %1413 = vmatpush.xpose.msra.mxu0 %v1328
    %1414 = vmatmul.f32.gmra.mxu0 %v1344
    %v1415 = vpop.f32.mrf.mxu0
    %v1416 = vadd.f32 %v1393, %v1415
    %1417 = vmatmul.f32.gmra.mxu0 %v1360
    %v1418 = vpop.f32.mrf.mxu0
    %v1419 = vadd.f32 %v1396, %v1418
    %1420 = vdwg.mxu0
    %1421 = vmatpush.xpose.msra.mxu0 0.0
    %1422 = vmatpush.xpose.msra.mxu0 0.0
    %1423 = vmatpush.xpose.msra.mxu0 0.0
    %1424 = vmatpush.xpose.msra.mxu0 0.0
    %1425 = vmatpush.xpose.msra.mxu0 0.0
    %1426 = vmatpush.xpose.msra.mxu0 0.0
    %1427 = vmatpush.xpose.msra.mxu0 0.0
    %1428 = vmatpush.xpose.msra.mxu0 0.0
    %1429 = vmatpush.xpose.msra.mxu0 0.0
    %1430 = vmatpush.xpose.msra.mxu0 0.0
    %1431 = vmatpush.xpose.msra.mxu0 0.0
    %1432 = vmatpush.xpose.msra.mxu0 0.0
    %1433 = vmatpush.xpose.msra.mxu0 0.0
    %1434 = vmatpush.xpose.msra.mxu0 0.0
    %1435 = vmatpush.xpose.msra.mxu0 0.0
    %1436 = vmatpush.xpose.msra.mxu0 %v1329
    %1437 = vmatmul.f32.gmra.mxu0 %v1345
    %v1438 = vpop.f32.mrf.mxu0
    %v1439 = vadd.f32 %v1416, %v1438
    %1440 = vmatmul.f32.gmra.mxu0 %v1361
    %v1441 = vpop.f32.mrf.mxu0
    %v1442 = vadd.f32 %v1419, %v1441
    %1443 = vdwg.mxu0
    %1444 = vmatpush.xpose.msra.mxu0 0.0
    %1445 = vmatpush.xpose.msra.mxu0 0.0
    %1446 = vmatpush.xpose.msra.mxu0 0.0
    %1447 = vmatpush.xpose.msra.mxu0 0.0
    %1448 = vmatpush.xpose.msra.mxu0 0.0
    %1449 = vmatpush.xpose.msra.mxu0 0.0
    %1450 = vmatpush.xpose.msra.mxu0 0.0
    %1451 = vmatpush.xpose.msra.mxu0 0.0
    %1452 = vmatpush.xpose.msra.mxu0 0.0
    %1453 = vmatpush.xpose.msra.mxu0 0.0
    %1454 = vmatpush.xpose.msra.mxu0 0.0
    %1455 = vmatpush.xpose.msra.mxu0 0.0
    %1456 = vmatpush.xpose.msra.mxu0 0.0
    %1457 = vmatpush.xpose.msra.mxu0 0.0
    %1458 = vmatpush.xpose.msra.mxu0 0.0
    %1459 = vmatpush.xpose.msra.mxu0 %v1330
    %1460 = vmatmul.f32.gmra.mxu0 %v1346
    %v1461 = vpop.f32.mrf.mxu0
    %v1462 = vadd.f32 %v1439, %v1461
    %1463 = vmatmul.f32.gmra.mxu0 %v1362
    %v1464 = vpop.f32.mrf.mxu0
    %v1465 = vadd.f32 %v1442, %v1464
    %1466 = vdwg.mxu0
    %1467 = vmatpush.xpose.msra.mxu0 0.0
    %1468 = vmatpush.xpose.msra.mxu0 0.0
    %1469 = vmatpush.xpose.msra.mxu0 0.0
    %1470 = vmatpush.xpose.msra.mxu0 0.0
    %1471 = vmatpush.xpose.msra.mxu0 0.0
    %1472 = vmatpush.xpose.msra.mxu0 0.0
    %1473 = vmatpush.xpose.msra.mxu0 0.0
    %1474 = vmatpush.xpose.msra.mxu0 0.0
    %1475 = vmatpush.xpose.msra.mxu0 0.0
    %1476 = vmatpush.xpose.msra.mxu0 0.0
    %1477 = vmatpush.xpose.msra.mxu0 0.0
    %1478 = vmatpush.xpose.msra.mxu0 0.0
    %1479 = vmatpush.xpose.msra.mxu0 0.0
    %1480 = vmatpush.xpose.msra.mxu0 0.0
    %1481 = vmatpush.xpose.msra.mxu0 0.0
    %1482 = vmatpush.xpose.msra.mxu0 %v1331
    %1483 = vmatmul.f32.gmra.mxu0 %v1347
    %v1484 = vpop.f32.mrf.mxu0
    %v1485 = vadd.f32 %v1462, %v1484
    %1486 = vmatmul.f32.gmra.mxu0 %v1363
    %v1487 = vpop.f32.mrf.mxu0
    %v1488 = vadd.f32 %v1465, %v1487
    %1489 = vdwg.mxu0
    %1490 = vmatpush.xpose.msra.mxu0 0.0
    %1491 = vmatpush.xpose.msra.mxu0 0.0
    %1492 = vmatpush.xpose.msra.mxu0 0.0
    %1493 = vmatpush.xpose.msra.mxu0 0.0
    %1494 = vmatpush.xpose.msra.mxu0 0.0
    %1495 = vmatpush.xpose.msra.mxu0 0.0
    %1496 = vmatpush.xpose.msra.mxu0 0.0
    %1497 = vmatpush.xpose.msra.mxu0 0.0
    %1498 = vmatpush.xpose.msra.mxu0 0.0
    %1499 = vmatpush.xpose.msra.mxu0 0.0
    %1500 = vmatpush.xpose.msra.mxu0 0.0
    %1501 = vmatpush.xpose.msra.mxu0 0.0
    %1502 = vmatpush.xpose.msra.mxu0 0.0
    %1503 = vmatpush.xpose.msra.mxu0 0.0
    %1504 = vmatpush.xpose.msra.mxu0 0.0
    %1505 = vmatpush.xpose.msra.mxu0 %v1332
    %1506 = vmatmul.f32.gmra.mxu0 %v1348
    %v1507 = vpop.f32.mrf.mxu0
    %v1508 = vadd.f32 %v1485, %v1507
    %1509 = vmatmul.f32.gmra.mxu0 %v1364
    %v1510 = vpop.f32.mrf.mxu0
    %v1511 = vadd.f32 %v1488, %v1510
    %1512 = vdwg.mxu0
    %1513 = vmatpush.xpose.msra.mxu0 0.0
    %1514 = vmatpush.xpose.msra.mxu0 0.0
    %1515 = vmatpush.xpose.msra.mxu0 0.0
    %1516 = vmatpush.xpose.msra.mxu0 0.0
    %1517 = vmatpush.xpose.msra.mxu0 0.0
    %1518 = vmatpush.xpose.msra.mxu0 0.0
    %1519 = vmatpush.xpose.msra.mxu0 0.0
    %1520 = vmatpush.xpose.msra.mxu0 0.0
    %1521 = vmatpush.xpose.msra.mxu0 0.0
    %1522 = vmatpush.xpose.msra.mxu0 0.0
    %1523 = vmatpush.xpose.msra.mxu0 0.0
    %1524 = vmatpush.xpose.msra.mxu0 0.0
    %1525 = vmatpush.xpose.msra.mxu0 0.0
    %1526 = vmatpush.xpose.msra.mxu0 0.0
    %1527 = vmatpush.xpose.msra.mxu0 0.0
    %1528 = vmatpush.xpose.msra.mxu0 %v1333
    %1529 = vmatmul.f32.gmra.mxu0 %v1349
    %v1530 = vpop.f32.mrf.mxu0
    %v1531 = vadd.f32 %v1508, %v1530
    %1532 = vmatmul.f32.gmra.mxu0 %v1365
    %v1533 = vpop.f32.mrf.mxu0
    %v1534 = vadd.f32 %v1511, %v1533
    %1535 = vdwg.mxu0
    %1536 = vmatpush.xpose.msra.mxu0 0.0
    %1537 = vmatpush.xpose.msra.mxu0 0.0
    %1538 = vmatpush.xpose.msra.mxu0 0.0
    %1539 = vmatpush.xpose.msra.mxu0 0.0
    %1540 = vmatpush.xpose.msra.mxu0 0.0
    %1541 = vmatpush.xpose.msra.mxu0 0.0
    %1542 = vmatpush.xpose.msra.mxu0 0.0
    %1543 = vmatpush.xpose.msra.mxu0 0.0
    %1544 = vmatpush.xpose.msra.mxu0 0.0
    %1545 = vmatpush.xpose.msra.mxu0 0.0
    %1546 = vmatpush.xpose.msra.mxu0 0.0
    %1547 = vmatpush.xpose.msra.mxu0 0.0
    %1548 = vmatpush.xpose.msra.mxu0 0.0
    %1549 = vmatpush.xpose.msra.mxu0 0.0
    %1550 = vmatpush.xpose.msra.mxu0 0.0
    %1551 = vmatpush.xpose.msra.mxu0 %v1334
    %1552 = vmatmul.f32.gmra.mxu0 %v1350
    %v1553 = vpop.f32.mrf.mxu0
    %v1554 = vadd.f32 %v1531, %v1553
    %1555 = vmatmul.f32.gmra.mxu0 %v1366
    %v1556 = vpop.f32.mrf.mxu0
    %v1557 = vadd.f32 %v1534, %v1556
    %1558 = vdwg.mxu0
    %1559 = vmatpush.xpose.msra.mxu0 0.0
    %1560 = vmatpush.xpose.msra.mxu0 0.0
    %1561 = vmatpush.xpose.msra.mxu0 0.0
    %1562 = vmatpush.xpose.msra.mxu0 0.0
    %1563 = vmatpush.xpose.msra.mxu0 0.0
    %1564 = vmatpush.xpose.msra.mxu0 0.0
    %1565 = vmatpush.xpose.msra.mxu0 0.0
    %1566 = vmatpush.xpose.msra.mxu0 0.0
    %1567 = vmatpush.xpose.msra.mxu0 0.0
    %1568 = vmatpush.xpose.msra.mxu0 0.0
    %1569 = vmatpush.xpose.msra.mxu0 0.0
    %1570 = vmatpush.xpose.msra.mxu0 0.0
    %1571 = vmatpush.xpose.msra.mxu0 0.0
    %1572 = vmatpush.xpose.msra.mxu0 0.0
    %1573 = vmatpush.xpose.msra.mxu0 0.0
    %1574 = vmatpush.xpose.msra.mxu0 %v1335
    %1575 = vmatmul.f32.gmra.mxu0 %v1351
    %v1576 = vpop.f32.mrf.mxu0
    %v1577 = vadd.f32 %v1554, %v1576
    %1578 = vmatmul.f32.gmra.mxu0 %v1367
    %v1579 = vpop.f32.mrf.mxu0
    %v1580 = vadd.f32 %v1557, %v1579
    %1581 = vdwg.mxu0
    %1582 = vmatpush.xpose.msra.mxu0 0.0
    %1583 = vmatpush.xpose.msra.mxu0 0.0
    %1584 = vmatpush.xpose.msra.mxu0 0.0
    %1585 = vmatpush.xpose.msra.mxu0 0.0
    %1586 = vmatpush.xpose.msra.mxu0 0.0
    %1587 = vmatpush.xpose.msra.mxu0 0.0
    %1588 = vmatpush.xpose.msra.mxu0 0.0
    %1589 = vmatpush.xpose.msra.mxu0 0.0
    %1590 = vmatpush.xpose.msra.mxu0 0.0
    %1591 = vmatpush.xpose.msra.mxu0 0.0
    %1592 = vmatpush.xpose.msra.mxu0 0.0
    %1593 = vmatpush.xpose.msra.mxu0 0.0
    %1594 = vmatpush.xpose.msra.mxu0 0.0
    %1595 = vmatpush.xpose.msra.mxu0 0.0
    %1596 = vmatpush.xpose.msra.mxu0 0.0
    %1597 = vmatpush.xpose.msra.mxu0 %v1336
    %1598 = vmatmul.f32.gmra.mxu0 %v1352
    %v1599 = vpop.f32.mrf.mxu0
    %v1600 = vadd.f32 %v1577, %v1599
    %1601 = vmatmul.f32.gmra.mxu0 %v1368
    %v1602 = vpop.f32.mrf.mxu0
    %v1603 = vadd.f32 %v1580, %v1602
    %1604 = vdwg.mxu0
    %1605 = vmatpush.xpose.msra.mxu0 0.0
    %1606 = vmatpush.xpose.msra.mxu0 0.0
    %1607 = vmatpush.xpose.msra.mxu0 0.0
    %1608 = vmatpush.xpose.msra.mxu0 0.0
    %1609 = vmatpush.xpose.msra.mxu0 0.0
    %1610 = vmatpush.xpose.msra.mxu0 0.0
    %1611 = vmatpush.xpose.msra.mxu0 0.0
    %1612 = vmatpush.xpose.msra.mxu0 0.0
    %1613 = vmatpush.xpose.msra.mxu0 0.0
    %1614 = vmatpush.xpose.msra.mxu0 0.0
    %1615 = vmatpush.xpose.msra.mxu0 0.0
    %1616 = vmatpush.xpose.msra.mxu0 0.0
    %1617 = vmatpush.xpose.msra.mxu0 0.0
    %1618 = vmatpush.xpose.msra.mxu0 0.0
    %1619 = vmatpush.xpose.msra.mxu0 0.0
    %1620 = vmatpush.xpose.msra.mxu0 %v1337
    %1621 = vmatmul.f32.gmra.mxu0 %v1353
    %v1622 = vpop.f32.mrf.mxu0
    %v1623 = vadd.f32 %v1600, %v1622
    %1624 = vmatmul.f32.gmra.mxu0 %v1369
    %v1625 = vpop.f32.mrf.mxu0
    %v1626 = vadd.f32 %v1603, %v1625
    %1627 = vdwg.mxu0
    %1628 = vmatpush.xpose.msra.mxu0 0.0
    %1629 = vmatpush.xpose.msra.mxu0 0.0
    %1630 = vmatpush.xpose.msra.mxu0 0.0
    %1631 = vmatpush.xpose.msra.mxu0 0.0
    %1632 = vmatpush.xpose.msra.mxu0 0.0
    %1633 = vmatpush.xpose.msra.mxu0 0.0
    %1634 = vmatpush.xpose.msra.mxu0 0.0
    %1635 = vmatpush.xpose.msra.mxu0 0.0
    %1636 = vmatpush.xpose.msra.mxu0 0.0
    %1637 = vmatpush.xpose.msra.mxu0 0.0
    %1638 = vmatpush.xpose.msra.mxu0 0.0
    %1639 = vmatpush.xpose.msra.mxu0 0.0
    %1640 = vmatpush.xpose.msra.mxu0 0.0
    %1641 = vmatpush.xpose.msra.mxu0 0.0
    %1642 = vmatpush.xpose.msra.mxu0 0.0
    %1643 = vmatpush.xpose.msra.mxu0 %v1338
    %1644 = vmatmul.f32.gmra.mxu0 %v1354
    %v1645 = vpop.f32.mrf.mxu0
    %v1646 = vadd.f32 %v1623, %v1645
    %1647 = vmatmul.f32.gmra.mxu0 %v1370
    %v1648 = vpop.f32.mrf.mxu0
    %v1649 = vadd.f32 %v1626, %v1648
    %1650 = vdwg.mxu0
    %1651 = vmatpush.xpose.msra.mxu0 0.0
    %1652 = vmatpush.xpose.msra.mxu0 0.0
    %1653 = vmatpush.xpose.msra.mxu0 0.0
    %1654 = vmatpush.xpose.msra.mxu0 0.0
    %1655 = vmatpush.xpose.msra.mxu0 0.0
    %1656 = vmatpush.xpose.msra.mxu0 0.0
    %1657 = vmatpush.xpose.msra.mxu0 0.0
    %1658 = vmatpush.xpose.msra.mxu0 0.0
    %1659 = vmatpush.xpose.msra.mxu0 0.0
    %1660 = vmatpush.xpose.msra.mxu0 0.0
    %1661 = vmatpush.xpose.msra.mxu0 0.0
    %1662 = vmatpush.xpose.msra.mxu0 0.0
    %1663 = vmatpush.xpose.msra.mxu0 0.0
    %1664 = vmatpush.xpose.msra.mxu0 0.0
    %1665 = vmatpush.xpose.msra.mxu0 0.0
    %1666 = vmatpush.xpose.msra.mxu0 %v1339
    %1667 = vmatmul.f32.gmra.mxu0 %v1355
    %v1668 = vpop.f32.mrf.mxu0
    %v1669 = vadd.f32 %v1646, %v1668
    %1670 = vmatmul.f32.gmra.mxu0 %v1371
    %v1671 = vpop.f32.mrf.mxu0
    %v1672 = vadd.f32 %v1649, %v1671
    %1673 = vdwg.mxu0
    %1674 = vmatpush.xpose.msra.mxu0 0.0
    %1675 = vmatpush.xpose.msra.mxu0 0.0
    %1676 = vmatpush.xpose.msra.mxu0 0.0
    %1677 = vmatpush.xpose.msra.mxu0 0.0
    %1678 = vmatpush.xpose.msra.mxu0 0.0
    %1679 = vmatpush.xpose.msra.mxu0 0.0
    %1680 = vmatpush.xpose.msra.mxu0 0.0
    %1681 = vmatpush.xpose.msra.mxu0 0.0
    %1682 = vmatpush.xpose.msra.mxu0 0.0
    %1683 = vmatpush.xpose.msra.mxu0 0.0
    %1684 = vmatpush.xpose.msra.mxu0 0.0
    %1685 = vmatpush.xpose.msra.mxu0 0.0
    %1686 = vmatpush.xpose.msra.mxu0 0.0
    %1687 = vmatpush.xpose.msra.mxu0 0.0
    %1688 = vmatpush.xpose.msra.mxu0 0.0
    %1689 = vmatpush.xpose.msra.mxu0 %v1340
    %1690 = vmatmul.f32.gmra.mxu0 %v1356
    %v1691 = vpop.f32.mrf.mxu0
    %v1692 = vadd.f32 %v1669, %v1691
    %1693 = vmatmul.f32.gmra.mxu0 %v1372
    %v1694 = vpop.f32.mrf.mxu0
    %v1695 = vadd.f32 %v1672, %v1694
    %1696 = vdwg.mxu0
    %1697 = vmatpush.xpose.msra.mxu0 0.0
    %1698 = vmatpush.xpose.msra.mxu0 0.0
    %1699 = vmatpush.xpose.msra.mxu0 0.0
    %1700 = vmatpush.xpose.msra.mxu0 0.0
    %1701 = vmatpush.xpose.msra.mxu0 0.0
    %1702 = vmatpush.xpose.msra.mxu0 0.0
    %1703 = vmatpush.xpose.msra.mxu0 0.0
    %1704 = vmatpush.xpose.msra.mxu0 0.0
    %1705 = vmatpush.xpose.msra.mxu0 0.0
    %1706 = vmatpush.xpose.msra.mxu0 0.0
    %1707 = vmatpush.xpose.msra.mxu0 0.0
    %1708 = vmatpush.xpose.msra.mxu0 0.0
    %1709 = vmatpush.xpose.msra.mxu0 0.0
    %1710 = vmatpush.xpose.msra.mxu0 0.0
    %1711 = vmatpush.xpose.msra.mxu0 0.0
    %1712 = vmatpush.xpose.msra.mxu0 %v1341
    %1713 = vmatmul.f32.gmra.mxu0 %v1357
    %v1714 = vpop.f32.mrf.mxu0
    %v1715 = vadd.f32 %v1692, %v1714
    %1716 = vmatmul.f32.gmra.mxu0 %v1373
    %v1717 = vpop.f32.mrf.mxu0
    %v1718 = vadd.f32 %v1695, %v1717
    %1719 = vdwg.mxu0
    %1720 = vmatpush.xpose.msra.mxu0 0.0
    %1721 = vmatpush.xpose.msra.mxu0 0.0
    %1722 = vmatpush.xpose.msra.mxu0 0.0
    %1723 = vmatpush.xpose.msra.mxu0 0.0
    %1724 = vmatpush.xpose.msra.mxu0 0.0
    %1725 = vmatpush.xpose.msra.mxu0 0.0
    %1726 = vmatpush.xpose.msra.mxu0 0.0
    %1727 = vmatpush.xpose.msra.mxu0 0.0
    %1728 = vmatpush.xpose.msra.mxu0 0.0
    %1729 = vmatpush.xpose.msra.mxu0 0.0
    %1730 = vmatpush.xpose.msra.mxu0 0.0
    %1731 = vmatpush.xpose.msra.mxu0 0.0
    %1732 = vmatpush.xpose.msra.mxu0 0.0
    %1733 = vmatpush.xpose.msra.mxu0 0.0
    %1734 = vmatpush.xpose.msra.mxu0 0.0
    %1735 = vmatpush.xpose.msra.mxu0 %v1342
    %1736 = vmatmul.f32.gmra.mxu0 %v1358
    %v1737 = vpop.f32.mrf.mxu0
    %v1738 = vadd.f32 %v1715, %v1737
    %1739 = vmatmul.f32.gmra.mxu0 %v1374
    %v1740 = vpop.f32.mrf.mxu0
    %v1741 = vadd.f32 %v1718, %v1740
    %1742 = vdwg.mxu0
    %v1743 = vmul.f32 %v1738, 0.5
    %v1744 = vmul.f32 %v1741, 0.5
    %1747 = vrot.lane.b32.xlu0 %v1743, 1
    %v1748 = vpop.permute.xlu0 %1747
    %1749 = vrot.lane.b32.xlu0 %v1744, 1
    %v1750 = vpop.permute.xlu0 %1749
    %v1753 = vadd.f32 %v1743, %v1748
    %v1754 = vadd.f32 %v1744, %v1750
    %v1755 = vld [vmem:[%s5] sm:$0x3]
    %1757 = vset.pattern.permute.xlu0 1
    %1758 = vperm.xlu0 %1757, %v1753
    %v1759 = vpop.permute.xlu0 %1758
    %1762 = vset.pattern.permute.xlu0 1
    %1763 = vperm.xlu0 %1762, %v1754
    %v1764 = vpop.permute.xlu0 %1763
    %v1766 = vperm.slane %v1755, 0
    %v1767 = vmul.f32 %v1759, %v1766
    %v1768 = vmul.f32 %v1764, %v1766
    %v1769 = vperm.slane %v1755, 1
    %v1770 = vadd.f32 %v1767, %v1769
    %v1771 = vadd.f32 %v1768, %v1769
    %v1772 = vmin.f32 %v1770, 0.0
    %v1773 = vmin.f32 %v1771, 0.0
    %v1774 = vld [vmem:[%s6] sm:$0xff]
    %v1775 = vld [vmem:[%s6 + $0x8] sm:$0xff]
    %v1776 = vld [vmem:[%s6 + $0x10] sm:$0xff]
    %v1777 = vld [vmem:[%s6 + $0x18] sm:$0xff]
    %v1778 = vld [vmem:[%s6 + $0x20] sm:$0x1]
    %v1779 = vperm.slane %v1778, 0
    %v1781 = vsel %vm331, %v1772, 0
    %v1784 = vsel %vm331, %v1773, 0
    %1786 = vmatpush.msra.mxu0 0.0
    %1787 = vmatpush.msra.mxu0 0.0
    %1788 = vmatpush.msra.mxu0 0.0
    %1789 = vmatpush.msra.mxu0 0.0
    %1790 = vmatpush.msra.mxu0 0.0
    %1791 = vmatpush.msra.mxu0 0.0
    %1792 = vmatpush.msra.mxu0 0.0
    %1793 = vmatpush.msra.mxu0 0.0
    %1794 = vmatpush.msra.mxu0 0.0
    %1795 = vmatpush.msra.mxu0 0.0
    %1796 = vmatpush.msra.mxu0 0.0
    %1797 = vmatpush.msra.mxu0 0.0
    %1798 = vmatpush.msra.mxu0 %v1777
    %1799 = vmatpush.msra.mxu0 %v1776
    %1800 = vmatpush.msra.mxu0 %v1775
    %1801 = vmatpush.msra.mxu0 %v1774
    %1802 = vmatmul.f32.gmra.mxu0 %v1781
    %v1803 = vpop.f32.mrf.mxu0
    %v1804 = vadd.f32 %v1779, %v1803
    %1805 = vmatmul.f32.gmra.mxu0 %v1784
    %v1806 = vpop.f32.mrf.mxu0
    %v1807 = vadd.f32 %v1779, %v1806
    %1808 = vdwg.mxu0
    %v1809 = vmul.f32 %v1804, 0.5
    %v1810 = vmul.f32 %v1807, 0.5
    %1813 = vrot.lane.b32.xlu0 %v1809, 2
    %v1814 = vpop.permute.xlu0 %1813
    %1815 = vrot.lane.b32.xlu0 %v1810, 2
    %v1816 = vpop.permute.xlu0 %1815
    %v1819 = vadd.f32 %v1743, %v1814
    %v1820 = vadd.f32 %v1744, %v1816
    %s1821 = scalar_lea.vmem %s5, 2
    %v1822 = vld [vmem:[%s1821] sm:$0x3]
    %1824 = vset.pattern.permute.xlu0 2
    %1825 = vperm.xlu0 %1824, %v1819
    %v1826 = vpop.permute.xlu0 %1825
    %1829 = vset.pattern.permute.xlu0 2
    %1830 = vperm.xlu0 %1829, %v1820
    %v1831 = vpop.permute.xlu0 %1830
    %v1833 = vperm.slane %v1822, 0
    %v1834 = vmul.f32 %v1826, %v1833
    %v1835 = vmul.f32 %v1831, %v1833
    %v1836 = vperm.slane %v1822, 1
    %v1837 = vadd.f32 %v1834, %v1836
    %v1838 = vadd.f32 %v1835, %v1836
    %v1839 = vmin.f32 %v1837, 0.0
    %v1840 = vmin.f32 %v1838, 0.0
    %s1841 = scalar_lea.vmem %s6, 40
    %v1842 = vld [vmem:[%s1841] sm:$0xff]
    %v1843 = vld [vmem:[%s1841 + $0x8] sm:$0xff]
    %v1844 = vld [vmem:[%s1841 + $0x10] sm:$0xff]
    %v1845 = vld [vmem:[%s1841 + $0x18] sm:$0xff]
    %v1846 = vld [vmem:[%s1841 + $0x20] sm:$0x1]
    %v1847 = vperm.slane %v1846, 0
    %v1849 = vsel %vm331, %v1839, 0
    %v1852 = vsel %vm331, %v1840, 0
    %1854 = vmatpush.msra.mxu0 0.0
    %1855 = vmatpush.msra.mxu0 0.0
    %1856 = vmatpush.msra.mxu0 0.0
    %1857 = vmatpush.msra.mxu0 0.0
    %1858 = vmatpush.msra.mxu0 0.0
    %1859 = vmatpush.msra.mxu0 0.0
    %1860 = vmatpush.msra.mxu0 0.0
    %1861 = vmatpush.msra.mxu0 0.0
    %1862 = vmatpush.msra.mxu0 0.0
    %1863 = vmatpush.msra.mxu0 0.0
    %1864 = vmatpush.msra.mxu0 0.0
    %1865 = vmatpush.msra.mxu0 0.0
    %1866 = vmatpush.msra.mxu0 %v1845
    %1867 = vmatpush.msra.mxu0 %v1844
    %1868 = vmatpush.msra.mxu0 %v1843
    %1869 = vmatpush.msra.mxu0 %v1842
    %1870 = vmatmul.f32.gmra.mxu0 %v1849
    %v1871 = vpop.f32.mrf.mxu0
    %v1872 = vadd.f32 %v1847, %v1871
    %1873 = vmatmul.f32.gmra.mxu0 %v1852
    %v1874 = vpop.f32.mrf.mxu0
    %v1875 = vadd.f32 %v1847, %v1874
    %1876 = vdwg.mxu0
    %vm1877 = vcmask 7168
    %1878 = vst.msk [vmem:[%s7] sm:$0xff] %vm1877, %v1872
    %1879 = vst.msk [vmem:[%s7 + $0x8] sm:$0xff] %vm1877, %v1875
    // Predicated region
    $region34: #{tpu_custom_call.1} parent=1 // pred_check
      _
    $region35: #{tpu_custom_call.1} parent=1 // pred_check_branch
      %1881 = sbr.rel (0) target = $region37
    $region36: #{tpu_custom_call.1} parent=1 // pred_region
      _
    $region37: #{tpu_custom_call.1} parent=1 // pred_fallthru
      _
    // Predicated region
    $region38: #{tpu_custom_call.1} parent=1 // pred_check
      _
    $region39: #{tpu_custom_call.1} parent=1 // pred_check_branch
      %1883 = sbr.rel (0) target = $region41
    $region40: #{tpu_custom_call.1} parent=1 // pred_region
      _
    $region41: #{tpu_custom_call.1} parent=1 // pred_fallthru
      _
    %1884 = vsyncpa [#allocation3], 1

</llo_original>
